<compile_context>
chip_gen: v6e
topology: v6e:2x2x1
jax: 0.10.0
libtpu: 0.0.40
codegen_flags: <defaults>
</compile_context>

<pallas_src>
import functools

import numpy as np
import jax
import jax.numpy as jnp
from jax.experimental import pallas as pl
from jax.experimental.pallas import tpu as pltpu


def _round_up(x, m):
    return ((x + m - 1) // m) * m


def _smcce_kernel(y_pred_ref, y_true_ref, out_ref,
                  m_all_ref, s_all_ref, a_aux_ref, m_pos_ref, s_pos_ref,
                  *, mask_zero: bool, epsilon: float, num_classes: int):
    """One (row-block, class-block) step.

    y_pred_ref: (TB, TC) logits tile (native dtype, cast to f32 here)
    y_true_ref: (TB, P)  int32 label indices (already remapped in the wrapper:
                labels >= num_classes -> padded-width sentinel, mask_zero label 0 -> -1)
    out_ref:    (1, TB)  f32 loss row (lane-dense), written on the last class step
    scratch:    five (TB, 1) f32 online accumulators
    """
    k = pl.program_id(1)
    num_k = pl.num_programs(1)

    yp = y_pred_ref[...].astype(jnp.float32)           # (TB, TC)
    yt = y_true_ref[...]                                # (TB, P) int32
    TB, TC = yp.shape
    P = yt.shape[-1]

    NEG = jnp.float32(-1e30)                            # stands in for -inf (exp-safe)

    # local (in-tile) class id of each lane; reused by the whole P loop
    lane = jax.lax.broadcasted_iota(jnp.int32, (TB, TC), 1)

    # ---- init accumulators on the first class tile of each row block ----
    @pl.when(k == 0)
    def _init():
        # number of labels hitting the appended zero class (originally == num_classes)
        npad = jnp.sum((yt >= num_classes).astype(jnp.float32), axis=-1, keepdims=True)
        zeros = jnp.zeros((TB, 1), jnp.float32)
        m_all_ref[...] = zeros                  # max over {0} ∪ yp_masked (appended 0 class)
        s_all_ref[...] = zeros + 1.0            # exp(0 - m_all) for the appended 0 class
        a_aux_ref[...] = npad                   # pad-class positives contribute exp(0 - m_all)
        m_pos_ref[...] = zeros                  # max over {0} ∪ (-gathered)
        s_pos_ref[...] = npad + 1.0             # pad-class positives + appended 0 in y_pos_1

    # ---- per-class label counts for this tile (no (TB,P,TC) materialization) ----
    local = yt - k * TC                         # (TB, P) tiny; compare against lane iota
    counts = jnp.zeros((TB, TC), jnp.float32)
    for p in range(P):                          # P is small; static unrolled loop
        counts = counts + (lane == local[:, p:p + 1]).astype(jnp.float32)

    if mask_zero:
        # class 0 is excluded from all_loss / aux; labels == 0 were remapped away in
        # the wrapper so counts never touch class 0 here.
        yp_m = jnp.where(lane == (0 - k * TC), NEG, yp)
    else:
        yp_m = yp

    # ---- online update: all_loss logsumexp and the aux numerator (shifted by m_all) ----
    m_old = m_all_ref[...]
    m_new = jnp.maximum(m_old, jnp.max(yp_m, axis=-1, keepdims=True))
    scale = jnp.exp(m_old - m_new)
    e_all = jnp.exp(yp_m - m_new)                                   # <= 1, shared pass
    s_all_ref[...] = s_all_ref[...] * scale + jnp.sum(e_all, axis=-1, keepdims=True)
    a_aux_ref[...] = a_aux_ref[...] * scale + jnp.sum(counts * e_all, axis=-1, keepdims=True)
    m_all_ref[...] = m_new

    # ---- online update: pos_loss logsumexp of -gathered ----
    neg_yp = -yp
    mp_old = m_pos_ref[...]
    cand = jnp.where(counts > 0.0, neg_yp, NEG)
    mp_new = jnp.maximum(mp_old, jnp.max(cand, axis=-1, keepdims=True))
    scale_p = jnp.exp(mp_old - mp_new)
    e_pos = jnp.exp(jnp.minimum(neg_yp - mp_new, 0.0))              # clamp keeps uncounted lanes safe
    s_pos_ref[...] = s_pos_ref[...] * scale_p + jnp.sum(counts * e_pos, axis=-1, keepdims=True)
    m_pos_ref[...] = mp_new

    # ---- finalize on the last class tile ----
    @pl.when(k == num_k - 1)
    def _finalize():
        all_loss = m_all_ref[...] + jnp.log(s_all_ref[...])
        pos_loss = m_pos_ref[...] + jnp.log(s_pos_ref[...])
        s = a_aux_ref[...] / s_all_ref[...]              # exp(lse(y_pos_2) - all_loss)
        aux = jnp.clip(1.0 - s, epsilon, 1.0)
        neg_loss = all_loss + jnp.log(aux)
        loss = pos_loss + neg_loss                       # (TB, 1), sublane-major

        # relayout the per-row column into a lane-dense row (masked sublane-sum)
        r = jax.lax.broadcasted_iota(jnp.int32, (TB, TB), 0)
        c = jax.lax.broadcasted_iota(jnp.int32, (TB, TB), 1)
        lane_loss = jnp.sum(jnp.where(r == c, loss, 0.0), axis=0, keepdims=True)  # (1, TB)
        out_ref[...] = lane_loss.astype(out_ref.dtype)


def sparse_multilabel_categorical_crossentropy(y_pred, y_true, *, mask_zero=False,
                                               epsilon=1e-7, block_rows=256,
                                               block_cols=1024):
    """Pallas TPU implementation of the module's forward pass."""
    lead_shape = y_pred.shape[:-1]
    C = int(y_pred.shape[-1])
    P = int(y_true.shape[-1])
    B = int(np.prod(lead_shape)) if lead_shape else 1

    yp = y_pred.reshape(B, C)                      # keep native dtype (bf16 stays bf16)
    yt = y_true.reshape(B, P).astype(jnp.int32)

    # --- tile sizing --------------------------------------------------------
    block_rows = max(8, (int(block_rows) // 8) * 8)
    if B <= block_rows:
        block_rows = _round_up(B, 8)               # single row block == full padded dim
        Bp = block_rows
    else:
        block_rows = max(128, (block_rows // 128) * 128)   # lane-dense output blocks
        Bp = _round_up(B, block_rows)

    block_cols = max(128, (int(block_cols) // 128) * 128)
    block_cols = min(block_cols, _round_up(C, 128))
    Cp = _round_up(C, block_cols)

    # --- label remap (tiny (B, P) op; removes all per-tile count masking) ---
    #   labels == num_classes (the appended zero class) -> Cp: never matches a column,
    #   handled analytically at accumulator init via the `>= num_classes` count.
    #   mask_zero labels == 0 -> -1: contribute nothing anywhere (matches the reference
    #   +inf / -inf gather semantics).
    yt = jnp.where(yt >= C, Cp, yt)
    if mask_zero:
        yt = jnp.where(yt == 0, -1, yt)

    # --- padding (classes padded with a very negative logit, rows with 0) ---
    if Cp > C:
        yp = jnp.pad(yp, ((0, 0), (0, Cp - C)), constant_values=-1e30)
    if Bp > B:
        yp = jnp.pad(yp, ((0, Bp - B), (0, 0)))
        yt = jnp.pad(yt, ((0, Bp - B), (0, 0)))

    nb = Bp // block_rows
    kc = Cp // block_cols

    kernel = functools.partial(_smcce_kernel, mask_zero=bool(mask_zero),
                               epsilon=float(epsilon), num_classes=C)

    out = pl.pallas_call(
        kernel,
        out_shape=jax.ShapeDtypeStruct((1, Bp), jnp.float32),
        grid_spec=pltpu.PrefetchScalarGridSpec(
            num_scalar_prefetch=0,
            grid=(nb, kc),
            in_specs=[
                pl.BlockSpec((block_rows, block_cols), lambda i, k: (i, k)),
                pl.BlockSpec((block_rows, P), lambda i, k: (i, 0)),
            ],
            out_specs=pl.BlockSpec((1, block_rows), lambda i, k: (0, i)),
            scratch_shapes=[pltpu.VMEM((block_rows, 1), jnp.float32)] * 5,
        ),
        compiler_params=pltpu.CompilerParams(
            dimension_semantics=("parallel", "arbitrary"),
            vmem_limit_bytes=32 * 1024 * 1024,
        ),
    )(yp, yt)

    return out.reshape(Bp)[:B].reshape(lead_shape)


def _reference(y_pred, y_true, *, mask_zero=False, epsilon=1e-7):
    """Pure-JAX transliteration of the PyTorch forward (for validation)."""
    from jax.scipy.special import logsumexp
    y_pred = y_pred.astype(jnp.float32)
    zeros = jnp.zeros_like(y_pred[..., :1])
    y_pred = jnp.concatenate([y_pred, zeros], axis=-1)
    if mask_zero:
        infs = zeros + jnp.inf
        y_pred = jnp.concatenate([infs, y_pred[..., 1:]], axis=-1)
    y_pos_2 = jnp.take_along_axis(y_pred, y_true, axis=-1)
    y_pos_1 = jnp.concatenate([y_pos_2, zeros], axis=-1)
    if mask_zero:
        y_pred = jnp.concatenate([-infs, y_pred[..., 1:]], axis=-1)
        y_pos_2 = jnp.take_along_axis(y_pred, y_true, axis=-1)
    pos_loss = logsumexp(-y_pos_1, axis=-1)
    all_loss = logsumexp(y_pred, axis=-1)
    aux_loss = logsumexp(y_pos_2, axis=-1) - all_loss
    aux_loss = jnp.clip(1.0 - jnp.exp(aux_loss), epsilon, 1.0)
    neg_loss = all_loss + jnp.log(aux_loss)
    return pos_loss + neg_loss


if __name__ == "__main__":
    # SparseMultilabelCategoricalCrossentropy has no learnable parameters.
    key = jax.random.PRNGKey(0)
    k1, k2, k3, k4 = jax.random.split(key, 4)

    # Test 1/2: aligned shapes, 2 row blocks x 2 class blocks; mask_zero False/True.
    batch, seq, num_classes, num_positive = 2, 128, 256, 8
    y_pred = jax.random.normal(k1, (batch, seq, num_classes), dtype=jnp.float32)
    y_true = jax.random.randint(k2, (batch, seq, num_positive), 0, num_classes + 1,
                                dtype=jnp.int32)
    for mz in (False, True):
        out = sparse_multilabel_categorical_crossentropy(
            y_pred, y_true, mask_zero=mz, block_rows=128, block_cols=128)
        out = jax.block_until_ready(out)
        ref = _reference(y_pred, y_true, mask_zero=mz)
        np.testing.assert_allclose(np.asarray(out), np.asarray(ref), rtol=5e-4, atol=5e-4)

    # Test 3: default tile sizes (single class tile path).
    out_d = sparse_multilabel_categorical_crossentropy(y_pred, y_true)
    out_d = jax.block_until_ready(out_d)
    np.testing.assert_allclose(np.asarray(out_d),
                               np.asarray(_reference(y_pred, y_true)),
                               rtol=5e-4, atol=5e-4)

    # Test 4: ragged shapes exercising row and class padding (incl. labels == C hitting
    # padded columns) together with mask_zero=True.
    b2, s2, c2, p2 = 2, 100, 200, 6
    y_pred2 = jax.random.normal(k3, (b2, s2, c2), dtype=jnp.float32)
    y_true2 = jax.random.randint(k4, (b2, s2, p2), 0, c2 + 1, dtype=jnp.int32)
    out2 = sparse_multilabel_categorical_crossentropy(
        y_pred2, y_true2, mask_zero=True, block_rows=128, block_cols=128)
    out2 = jax.block_until_ready(out2)
    ref2 = _reference(y_pred2, y_true2, mask_zero=True)
    np.testing.assert_allclose(np.asarray(out2), np.asarray(ref2), rtol=5e-4, atol=5e-4)

    print("KERNEL_OK")
</pallas_src>

<mosaic_0001>
module attributes {stable_mosaic.version = 11 : i64} {
  func.func @_smcce_kernel(%arg0: i32, %arg1: i32, %arg2: memref<128x128xf32, #tpu.memory_space<vmem>>, %arg3: memref<128x8xi32, #tpu.memory_space<vmem>>, %arg4: memref<1x128xf32, #tpu.memory_space<vmem>>, %arg5: memref<128x1xf32, #tpu.memory_space<vmem>>, %arg6: memref<128x1xf32, #tpu.memory_space<vmem>>, %arg7: memref<128x1xf32, #tpu.memory_space<vmem>>, %arg8: memref<128x1xf32, #tpu.memory_space<vmem>>, %arg9: memref<128x1xf32, #tpu.memory_space<vmem>>) attributes {dimension_semantics = [#tpu.dimension_semantics<parallel>, #tpu.dimension_semantics<arbitrary>], iteration_bounds = array<i64: 2, 2>, scalar_prefetch = 0 : i64, scratch_operands = 5 : i64, tpu.core_type = #tpu.core_type<tc>, window_params = [{transform_indices = @transform_0, window_bounds = array<i64: 128, 128>}, {transform_indices = @transform_1, window_bounds = array<i64: 128, 8>}, {transform_indices = @transform_2, window_bounds = array<i64: 1, 128>}]} {
    %c0 = arith.constant 0 : index
    %c0_0 = arith.constant 0 : index
    %0 = vector.load %arg2[%c0, %c0_0] : memref<128x128xf32, #tpu.memory_space<vmem>>, vector<128x128xf32>
    %c0_1 = arith.constant 0 : index
    %c0_2 = arith.constant 0 : index
    %1 = vector.load %arg3[%c0_1, %c0_2] : memref<128x8xi32, #tpu.memory_space<vmem>>, vector<128x8xi32>
    %2 = tpu.iota {dimensions = array<i32: 1>} : vector<128x128xi32>
    %c0_i32 = arith.constant 0 : i32
    %3 = arith.cmpi eq, %arg1, %c0_i32 : i32
    %4 = arith.extui %3 : i1 to i32
    %c0_i32_3 = arith.constant 0 : i32
    %5 = arith.cmpi ne, %4, %c0_i32_3 : i32
    scf.if %5 {
      %c256_i32 = arith.constant 256 : i32
      %109 = vector.broadcast %c256_i32 : i32 to vector<128x8xi32>
      %110 = arith.cmpi sge, %1, %109 : vector<128x8xi32>
      %111 = arith.extui %110 : vector<128x8xi1> to vector<128x8xi32>
      %112 = arith.sitofp %111 : vector<128x8xi32> to vector<128x8xf32>
      %cst_34 = arith.constant dense<0.000000e+00> : vector<128xf32>
      %113 = vector.multi_reduction <add>, %112, %cst_34 [1] : vector<128x8xf32> to vector<128xf32>
      %114 = vector.shape_cast %113 : vector<128xf32> to vector<128x1xf32>
      %cst_35 = arith.constant 0.000000e+00 : f32
      %115 = vector.broadcast %cst_35 : f32 to vector<128x1xf32>
      %c0_36 = arith.constant 0 : index
      %c0_37 = arith.constant 0 : index
      %116 = vector.load %arg5[%c0_36, %c0_37] : memref<128x1xf32, #tpu.memory_space<vmem>>, vector<128x1xf32>
      tpu.vector_store %arg5[%c0_36, %c0_37], %115 {strides = array<i32>} : memref<128x1xf32, #tpu.memory_space<vmem>>, vector<128x1xf32>,
      %cst_38 = arith.constant 1.000000e+00 : f32
      %117 = vector.broadcast %cst_38 : f32 to vector<128x1xf32>
      %118 = arith.addf %115, %117 : vector<128x1xf32>
      %c0_39 = arith.constant 0 : index
      %c0_40 = arith.constant 0 : index
      %119 = vector.load %arg6[%c0_39, %c0_40] : memref<128x1xf32, #tpu.memory_space<vmem>>, vector<128x1xf32>
      tpu.vector_store %arg6[%c0_39, %c0_40], %118 {strides = array<i32>} : memref<128x1xf32, #tpu.memory_space<vmem>>, vector<128x1xf32>,
      %c0_41 = arith.constant 0 : index
      %c0_42 = arith.constant 0 : index
      %120 = vector.load %arg7[%c0_41, %c0_42] : memref<128x1xf32, #tpu.memory_space<vmem>>, vector<128x1xf32>
      tpu.vector_store %arg7[%c0_41, %c0_42], %114 {strides = array<i32>} : memref<128x1xf32, #tpu.memory_space<vmem>>, vector<128x1xf32>,
      %c0_43 = arith.constant 0 : index
      %c0_44 = arith.constant 0 : index
      %121 = vector.load %arg8[%c0_43, %c0_44] : memref<128x1xf32, #tpu.memory_space<vmem>>, vector<128x1xf32>
      tpu.vector_store %arg8[%c0_43, %c0_44], %115 {strides = array<i32>} : memref<128x1xf32, #tpu.memory_space<vmem>>, vector<128x1xf32>,
      %cst_45 = arith.constant 1.000000e+00 : f32
      %122 = vector.broadcast %cst_45 : f32 to vector<128x1xf32>
      %123 = arith.addf %114, %122 : vector<128x1xf32>
      %c0_46 = arith.constant 0 : index
      %c0_47 = arith.constant 0 : index
      %124 = vector.load %arg9[%c0_46, %c0_47] : memref<128x1xf32, #tpu.memory_space<vmem>>, vector<128x1xf32>
      tpu.vector_store %arg9[%c0_46, %c0_47], %123 {strides = array<i32>} : memref<128x1xf32, #tpu.memory_space<vmem>>, vector<128x1xf32>,
    } else {
    }
    %c128_i32 = arith.constant 128 : i32
    %6 = arith.muli %arg1, %c128_i32 : i32
    %7 = vector.broadcast %6 : i32 to vector<128x8xi32>
    %8 = arith.subi %1, %7 : vector<128x8xi32>
    %cst = arith.constant 0.000000e+00 : f32
    %9 = vector.broadcast %cst : f32 to vector<128x128xf32>
    %10 = vector.extract_strided_slice %8 {offsets = [0, 0], sizes = [128, 1], strides = [1, 1]} : vector<128x8xi32> to vector<128x1xi32>
    %11 = vector.broadcast %10 : vector<128x1xi32> to vector<128x128xi32>
    %12 = arith.cmpi eq, %2, %11 : vector<128x128xi32>
    %13 = arith.extui %12 : vector<128x128xi1> to vector<128x128xi32>
    %14 = arith.sitofp %13 : vector<128x128xi32> to vector<128x128xf32>
    %15 = arith.addf %9, %14 : vector<128x128xf32>
    %16 = vector.extract_strided_slice %8 {offsets = [0, 1], sizes = [128, 1], strides = [1, 1]} : vector<128x8xi32> to vector<128x1xi32>
    %17 = vector.broadcast %16 : vector<128x1xi32> to vector<128x128xi32>
    %18 = arith.cmpi eq, %2, %17 : vector<128x128xi32>
    %19 = arith.extui %18 : vector<128x128xi1> to vector<128x128xi32>
    %20 = arith.sitofp %19 : vector<128x128xi32> to vector<128x128xf32>
    %21 = arith.addf %15, %20 : vector<128x128xf32>
    %22 = vector.extract_strided_slice %8 {offsets = [0, 2], sizes = [128, 1], strides = [1, 1]} : vector<128x8xi32> to vector<128x1xi32>
    %23 = vector.broadcast %22 : vector<128x1xi32> to vector<128x128xi32>
    %24 = arith.cmpi eq, %2, %23 : vector<128x128xi32>
    %25 = arith.extui %24 : vector<128x128xi1> to vector<128x128xi32>
    %26 = arith.sitofp %25 : vector<128x128xi32> to vector<128x128xf32>
    %27 = arith.addf %21, %26 : vector<128x128xf32>
    %28 = vector.extract_strided_slice %8 {offsets = [0, 3], sizes = [128, 1], strides = [1, 1]} : vector<128x8xi32> to vector<128x1xi32>
    %29 = vector.broadcast %28 : vector<128x1xi32> to vector<128x128xi32>
    %30 = arith.cmpi eq, %2, %29 : vector<128x128xi32>
    %31 = arith.extui %30 : vector<128x128xi1> to vector<128x128xi32>
    %32 = arith.sitofp %31 : vector<128x128xi32> to vector<128x128xf32>
    %33 = arith.addf %27, %32 : vector<128x128xf32>
    %34 = vector.extract_strided_slice %8 {offsets = [0, 4], sizes = [128, 1], strides = [1, 1]} : vector<128x8xi32> to vector<128x1xi32>
    %35 = vector.broadcast %34 : vector<128x1xi32> to vector<128x128xi32>
    %36 = arith.cmpi eq, %2, %35 : vector<128x128xi32>
    %37 = arith.extui %36 : vector<128x128xi1> to vector<128x128xi32>
    %38 = arith.sitofp %37 : vector<128x128xi32> to vector<128x128xf32>
    %39 = arith.addf %33, %38 : vector<128x128xf32>
    %40 = vector.extract_strided_slice %8 {offsets = [0, 5], sizes = [128, 1], strides = [1, 1]} : vector<128x8xi32> to vector<128x1xi32>
    %41 = vector.broadcast %40 : vector<128x1xi32> to vector<128x128xi32>
    %42 = arith.cmpi eq, %2, %41 : vector<128x128xi32>
    %43 = arith.extui %42 : vector<128x128xi1> to vector<128x128xi32>
    %44 = arith.sitofp %43 : vector<128x128xi32> to vector<128x128xf32>
    %45 = arith.addf %39, %44 : vector<128x128xf32>
    %46 = vector.extract_strided_slice %8 {offsets = [0, 6], sizes = [128, 1], strides = [1, 1]} : vector<128x8xi32> to vector<128x1xi32>
    %47 = vector.broadcast %46 : vector<128x1xi32> to vector<128x128xi32>
    %48 = arith.cmpi eq, %2, %47 : vector<128x128xi32>
    %49 = arith.extui %48 : vector<128x128xi1> to vector<128x128xi32>
    %50 = arith.sitofp %49 : vector<128x128xi32> to vector<128x128xf32>
    %51 = arith.addf %45, %50 : vector<128x128xf32>
    %52 = vector.extract_strided_slice %8 {offsets = [0, 7], sizes = [128, 1], strides = [1, 1]} : vector<128x8xi32> to vector<128x1xi32>
    %53 = vector.broadcast %52 : vector<128x1xi32> to vector<128x128xi32>
    %54 = arith.cmpi eq, %2, %53 : vector<128x128xi32>
    %55 = arith.extui %54 : vector<128x128xi1> to vector<128x128xi32>
    %56 = arith.sitofp %55 : vector<128x128xi32> to vector<128x128xf32>
    %57 = arith.addf %51, %56 : vector<128x128xf32>
    %c0_4 = arith.constant 0 : index
    %c0_5 = arith.constant 0 : index
    %58 = vector.load %arg5[%c0_4, %c0_5] : memref<128x1xf32, #tpu.memory_space<vmem>>, vector<128x1xf32>
    %cst_6 = arith.constant dense<0xFF800000> : vector<128xf32>
    %59 = vector.multi_reduction <maximumf>, %0, %cst_6 [1] : vector<128x128xf32> to vector<128xf32>
    %60 = vector.shape_cast %59 : vector<128xf32> to vector<128x1xf32>
    %61 = arith.maximumf %58, %60 : vector<128x1xf32>
    %62 = arith.subf %58, %61 : vector<128x1xf32>
    %63 = math.exp %62 : vector<128x1xf32>
    %64 = vector.broadcast %61 : vector<128x1xf32> to vector<128x128xf32>
    %65 = arith.subf %0, %64 : vector<128x128xf32>
    %66 = math.exp %65 : vector<128x128xf32>
    %c0_7 = arith.constant 0 : index
    %c0_8 = arith.constant 0 : index
    %67 = vector.load %arg6[%c0_7, %c0_8] : memref<128x1xf32, #tpu.memory_space<vmem>>, vector<128x1xf32>
    %68 = arith.mulf %67, %63 : vector<128x1xf32>
    %cst_9 = arith.constant dense<0.000000e+00> : vector<128xf32>
    %69 = vector.multi_reduction <add>, %66, %cst_9 [1] : vector<128x128xf32> to vector<128xf32>
    %70 = vector.shape_cast %69 : vector<128xf32> to vector<128x1xf32>
    %71 = arith.addf %68, %70 : vector<128x1xf32>
    %c0_10 = arith.constant 0 : index
    %c0_11 = arith.constant 0 : index
    %72 = vector.load %arg6[%c0_10, %c0_11] : memref<128x1xf32, #tpu.memory_space<vmem>>, vector<128x1xf32>
    tpu.vector_store %arg6[%c0_10, %c0_11], %71 {strides = array<i32>} : memref<128x1xf32, #tpu.memory_space<vmem>>, vector<128x1xf32>,
    %c0_12 = arith.constant 0 : index
    %c0_13 = arith.constant 0 : index
    %73 = vector.load %arg7[%c0_12, %c0_13] : memref<128x1xf32, #tpu.memory_space<vmem>>, vector<128x1xf32>
    %74 = arith.mulf %73, %63 : vector<128x1xf32>
    %75 = arith.mulf %57, %66 : vector<128x128xf32>
    %cst_14 = arith.constant dense<0.000000e+00> : vector<128xf32>
    %76 = vector.multi_reduction <add>, %75, %cst_14 [1] : vector<128x128xf32> to vector<128xf32>
    %77 = vector.shape_cast %76 : vector<128xf32> to vector<128x1xf32>
    %78 = arith.addf %74, %77 : vector<128x1xf32>
    %c0_15 = arith.constant 0 : index
    %c0_16 = arith.constant 0 : index
    %79 = vector.load %arg7[%c0_15, %c0_16] : memref<128x1xf32, #tpu.memory_space<vmem>>, vector<128x1xf32>
    tpu.vector_store %arg7[%c0_15, %c0_16], %78 {strides = array<i32>} : memref<128x1xf32, #tpu.memory_space<vmem>>, vector<128x1xf32>,
    %c0_17 = arith.constant 0 : index
    %c0_18 = arith.constant 0 : index
    %80 = vector.load %arg5[%c0_17, %c0_18] : memref<128x1xf32, #tpu.memory_space<vmem>>, vector<128x1xf32>
    tpu.vector_store %arg5[%c0_17, %c0_18], %61 {strides = array<i32>} : memref<128x1xf32, #tpu.memory_space<vmem>>, vector<128x1xf32>,
    %cst_19 = arith.constant 0.000000e+00 : f32
    %81 = vector.broadcast %cst_19 : f32 to vector<128x128xf32>
    %82 = arith.subf %81, %0 : vector<128x128xf32>
    %c0_20 = arith.constant 0 : index
    %c0_21 = arith.constant 0 : index
    %83 = vector.load %arg8[%c0_20, %c0_21] : memref<128x1xf32, #tpu.memory_space<vmem>>, vector<128x1xf32>
    %cst_22 = arith.constant 0.000000e+00 : f32
    %84 = vector.broadcast %cst_22 : f32 to vector<128x128xf32>
    %85 = arith.cmpf ogt, %57, %84 : vector<128x128xf32>
    %cst_23 = arith.constant -1.000000e+30 : f32
    %86 = vector.broadcast %cst_23 : f32 to vector<128x128xf32>
    %87 = arith.select %85, %82, %86 : vector<128x128xi1>, vector<128x128xf32>
    %cst_24 = arith.constant dense<0xFF800000> : vector<128xf32>
    %88 = vector.multi_reduction <maximumf>, %87, %cst_24 [1] : vector<128x128xf32> to vector<128xf32>
    %89 = vector.shape_cast %88 : vector<128xf32> to vector<128x1xf32>
    %90 = arith.maximumf %83, %89 : vector<128x1xf32>
    %91 = arith.subf %83, %90 : vector<128x1xf32>
    %92 = math.exp %91 : vector<128x1xf32>
    %93 = vector.broadcast %90 : vector<128x1xf32> to vector<128x128xf32>
    %94 = arith.subf %82, %93 : vector<128x128xf32>
    %cst_25 = arith.constant 0.000000e+00 : f32
    %95 = vector.broadcast %cst_25 : f32 to vector<128x128xf32>
    %96 = arith.minimumf %94, %95 : vector<128x128xf32>
    %97 = math.exp %96 : vector<128x128xf32>
    %c0_26 = arith.constant 0 : index
    %c0_27 = arith.constant 0 : index
    %98 = vector.load %arg9[%c0_26, %c0_27] : memref<128x1xf32, #tpu.memory_space<vmem>>, vector<128x1xf32>
    %99 = arith.mulf %98, %92 : vector<128x1xf32>
    %100 = arith.mulf %57, %97 : vector<128x128xf32>
    %cst_28 = arith.constant dense<0.000000e+00> : vector<128xf32>
    %101 = vector.multi_reduction <add>, %100, %cst_28 [1] : vector<128x128xf32> to vector<128xf32>
    %102 = vector.shape_cast %101 : vector<128xf32> to vector<128x1xf32>
    %103 = arith.addf %99, %102 : vector<128x1xf32>
    %c0_29 = arith.constant 0 : index
    %c0_30 = arith.constant 0 : index
    %104 = vector.load %arg9[%c0_29, %c0_30] : memref<128x1xf32, #tpu.memory_space<vmem>>, vector<128x1xf32>
    tpu.vector_store %arg9[%c0_29, %c0_30], %103 {strides = array<i32>} : memref<128x1xf32, #tpu.memory_space<vmem>>, vector<128x1xf32>,
    %c0_31 = arith.constant 0 : index
    %c0_32 = arith.constant 0 : index
    %105 = vector.load %arg8[%c0_31, %c0_32] : memref<128x1xf32, #tpu.memory_space<vmem>>, vector<128x1xf32>
    tpu.vector_store %arg8[%c0_31, %c0_32], %90 {strides = array<i32>} : memref<128x1xf32, #tpu.memory_space<vmem>>, vector<128x1xf32>,
    %c1_i32 = arith.constant 1 : i32
    %106 = arith.cmpi eq, %arg1, %c1_i32 : i32
    %107 = arith.extui %106 : i1 to i32
    %c0_i32_33 = arith.constant 0 : i32
    %108 = arith.cmpi ne, %107, %c0_i32_33 : i32
    scf.if %108 {
      %c0_34 = arith.constant 0 : index
      %c0_35 = arith.constant 0 : index
      %109 = vector.load %arg5[%c0_34, %c0_35] : memref<128x1xf32, #tpu.memory_space<vmem>>, vector<128x1xf32>
      %c0_36 = arith.constant 0 : index
      %c0_37 = arith.constant 0 : index
      %110 = vector.load %arg6[%c0_36, %c0_37] : memref<128x1xf32, #tpu.memory_space<vmem>>, vector<128x1xf32>
      %111 = math.log %110 : vector<128x1xf32>
      %112 = arith.addf %109, %111 : vector<128x1xf32>
      %c0_38 = arith.constant 0 : index
      %c0_39 = arith.constant 0 : index
      %113 = vector.load %arg8[%c0_38, %c0_39] : memref<128x1xf32, #tpu.memory_space<vmem>>, vector<128x1xf32>
      %c0_40 = arith.constant 0 : index
      %c0_41 = arith.constant 0 : index
      %114 = vector.load %arg9[%c0_40, %c0_41] : memref<128x1xf32, #tpu.memory_space<vmem>>, vector<128x1xf32>
      %115 = math.log %114 : vector<128x1xf32>
      %116 = arith.addf %113, %115 : vector<128x1xf32>
      %c0_42 = arith.constant 0 : index
      %c0_43 = arith.constant 0 : index
      %117 = vector.load %arg7[%c0_42, %c0_43] : memref<128x1xf32, #tpu.memory_space<vmem>>, vector<128x1xf32>
      %c0_44 = arith.constant 0 : index
      %c0_45 = arith.constant 0 : index
      %118 = vector.load %arg6[%c0_44, %c0_45] : memref<128x1xf32, #tpu.memory_space<vmem>>, vector<128x1xf32>
      %119 = arith.divf %117, %118 : vector<128x1xf32>
      %cst_46 = arith.constant 1.000000e+00 : f32
      %120 = vector.broadcast %cst_46 : f32 to vector<128x1xf32>
      %121 = arith.subf %120, %119 : vector<128x1xf32>
      %cst_47 = arith.constant 1.000000e-07 : f32
      %cst_48 = arith.constant 1.000000e+00 : f32
      %122 = vector.broadcast %cst_47 : f32 to vector<128x1xf32>
      %123 = arith.maximumf %122, %121 : vector<128x1xf32>
      %124 = vector.broadcast %cst_48 : f32 to vector<128x1xf32>
      %125 = arith.minimumf %124, %123 : vector<128x1xf32>
      %126 = math.log %125 : vector<128x1xf32>
      %127 = arith.addf %112, %126 : vector<128x1xf32>
      %128 = arith.addf %116, %127 : vector<128x1xf32>
      %129 = tpu.iota {dimensions = array<i32: 0>} : vector<128x128xi32>
      %130 = tpu.iota {dimensions = array<i32: 1>} : vector<128x128xi32>
      %131 = arith.cmpi eq, %129, %130 : vector<128x128xi32>
      %cst_49 = arith.constant 0.000000e+00 : f32
      %132 = vector.shape_cast %128 : vector<128x1xf32> to vector<128x1xf32>
      %133 = vector.broadcast %132 : vector<128x1xf32> to vector<128x128xf32>
      %134 = vector.broadcast %cst_49 : f32 to vector<128x128xf32>
      %135 = arith.select %131, %133, %134 : vector<128x128xi1>, vector<128x128xf32>
      %cst_50 = arith.constant dense<0.000000e+00> : vector<128xf32>
      %136 = vector.multi_reduction <add>, %135, %cst_50 [0] : vector<128x128xf32> to vector<128xf32>
      %137 = vector.shape_cast %136 : vector<128xf32> to vector<1x128xf32>
      %c0_51 = arith.constant 0 : index
      %c0_52 = arith.constant 0 : index
      %138 = vector.load %arg4[%c0_51, %c0_52] : memref<1x128xf32, #tpu.memory_space<vmem>>, vector<1x128xf32>
      tpu.vector_store %arg4[%c0_51, %c0_52], %137 {strides = array<i32>} : memref<1x128xf32, #tpu.memory_space<vmem>>, vector<1x128xf32>,
    } else {
    }
    return
  }
  func.func @transform_0(%arg0: i32, %arg1: i32) -> (i32, i32) {
    %c0_i32 = arith.constant 0 : i32
    return %arg0, %arg1 : i32, i32
  }
  func.func @transform_1(%arg0: i32, %arg1: i32) -> (i32, i32) {
    %c0_i32 = arith.constant 0 : i32
    %c0_i32_0 = arith.constant 0 : i32
    return %arg0, %c0_i32 : i32, i32
  }
  func.func @transform_2(%arg0: i32, %arg1: i32) -> (i32, i32) {
    %c0_i32 = arith.constant 0 : i32
    %c0_i32_0 = arith.constant 0 : i32
    return %c0_i32, %arg0 : i32, i32
  }
}

</mosaic_0001>

<llo_original>
// kernel: tpu_custom_call.1
$region0: #{tpu_custom_call.1}
  #allocation0 [shape = 'u32[]', space=smem, size = 0x4, offset = 0x4, fixed_abs, tag = 'smem constant byte address 0x4 - core index']
  #allocation1 [shape = 'u32[144,128]{1,0:T(1,128)}', space=vmem, size = 0x12000, scoped, tag = 'internal scratch']
  #allocation2 [shape = 'f32[128,1]{1,0:T(8,128)}', space=vmem, size = 0x10000, scoped, tag = 'scratch operand']
  #allocation3 [shape = 'f32[128,1]{1,0:T(8,128)}', space=vmem, size = 0x10000, scoped, tag = 'scratch operand']
  #allocation4 [shape = 'f32[128,1]{1,0:T(8,128)}', space=vmem, size = 0x10000, scoped, tag = 'scratch operand']
  #allocation5 [shape = 'f32[128,1]{1,0:T(8,128)}', space=vmem, size = 0x10000, scoped, tag = 'scratch operand']
  #allocation6 [shape = 'f32[128,1]{1,0:T(8,128)}', space=vmem, size = 0x10000, scoped, tag = 'scratch operand']
  %s0 = inlined_call_operand.hbm [shape: f32[256,256], index: 0, kind: input, shape index: {}]
  %s1 = inlined_call_operand.vmem [shape: s32[256,8], index: 1, kind: input, shape index: {}]
  %s2 = inlined_call_operand.hbm [shape: f32[1,256], index: 2, kind: output, shape index: {}]
  %s3 = sld [smem:[#allocation0]]
  $region53: #{tpu_custom_call.1} parent=0
    _
  %s5 = ssub.s32 1, %s3
  %s6 = scalar_select 0, %s5, %s3
  $region1: #{tpu_custom_call.1} parent=0
    #allocation7 [shape = 'u8[131072]{0}', space=vmem, size = 0x20000, scoped, tag = 'input window, operand 0']
    #allocation8 [shape = 's32[2]{0}', space=sflag, size = 0x8, scoped, tag = 'scoped memory for tpu_custom_call.1']
    #allocation9 [shape = 's32[2]{0}', space=sflag, size = 0x8, scoped, tag = 'scoped memory for tpu_custom_call.1']
    #allocation10 [shape = 'u8[1024]{0}', space=vmem, size = 0x400, scoped, tag = 'output window, operand 0']
    %7 = vsyncpa [#allocation8], 0
    %s8 = scalar_lea.sflag [#allocation8], 1
    %9 = vsyncpa %s8, 0
    %10 = vsyncpa [#allocation9], 0
    %s11 = scalar_lea.sflag [#allocation9], 1
    %12 = vsyncpa %s11, 0
    loop: start=0, step=1, limit=6
    $region2: #{tpu_custom_call.1} parent=1 // loop_pre_header
      _
    $region3: #{tpu_custom_call.1} parent=1 // loop_header
      %s14 = sphi 0, %s18
      %p15 = scmp.ge.s32.totalorder %s14, 6
      %s21 = sphi 0, %s33
      %s22 = sphi 0, %s29
      %s23 = sphi 0, %s21
      %s24 = sphi 0, %s22
      %s25 = sphi 0, %s23
      %s26 = sphi 0, %s24
      %s38 = sphi 0, %s40
      %s41 = sphi 0, %s38
      %s42 = sphi 0, %s41
      %s58 = sphi 0, %s42
      %s64 = sphi 0, %s66
      %s67 = sphi 0, %s64
      %s68 = sphi 0, %s67
      %s84 = sphi 0, %s68
      %s90 = sphi 0, %s92
      %s93 = sphi 0, %s90
      %s94 = sphi 0, %s93
      %s110 = sphi 0, %s94
    $region4: #{tpu_custom_call.1} parent=1 // loop_header_branch
      %17 = sbr.rel (%p15) target = $region8
    $region5: #{tpu_custom_call.1} parent=1 // loop_body
      %s19 = ssub.s32 %s14, 1
      %s20 = ssub.s32 %s14, 2
      %s27 = sadd.s32 1, %s22
      %p28 = scmp.ge.s32.totalorder %s27, 2
      %s29 = scalar_select %p28, 0, %s27
      %s30 = sadd.s32 1, %s21
      %s31 = scalar_select %p28, %s30, %s21
      %p32 = scmp.ge.s32.totalorder %s31, 2
      %s33 = scalar_select %p32, 0, %s31
      %s34 = ssub.s32 %s21, %s33
      %s35 = ssub.s32 %s22, %s29
      %s36 = sor.u32 %s34, %s35
      %p37 = scmp.eq.s32.totalorder %s36, 0
      %s39 = sadd.s32 %s38, 1
      %s40 = scalar_select %p37, %s38, %s39
      %p43 = pneg %p37
      %p44 = scmp.eq.s32.totalorder %s14, 3
      %p45 = por %p43, %p44
      %p46 = scmp.ne.s32.totalorder %s38, %s41
      %p47 = scmp.eq.s32.totalorder %s14, 0
      %p48 = por %p46, %p47
      %p49 = scmp.ne.s32.totalorder %s38, %s41
      %p50 = scmp.eq.s32.totalorder %s19, 3
      %p51 = por %p49, %p50
      %p52 = scmp.ne.s32.totalorder %s41, %s42
      %p53 = scmp.eq.s32.totalorder %s19, 0
      %p54 = por %p52, %p53
      %p55 = scmp.ne.s32.totalorder %s41, %s42
      %p56 = scmp.eq.s32.totalorder %s20, 3
      %p57 = por %p55, %p56
      %p59 = scmp.ne.s32.totalorder %s42, %s58
      %p60 = scmp.eq.s32.totalorder %s20, 0
      %p61 = por %p59, %p60
      %s62 = ssub.s32 %s21, %s33
      %p63 = scmp.eq.s32.totalorder %s62, 0
      %s65 = sadd.s32 %s64, 1
      %s66 = scalar_select %p63, %s64, %s65
      %p69 = pneg %p63
      %p70 = scmp.eq.s32.totalorder %s14, 3
      %p71 = por %p69, %p70
      %p72 = scmp.ne.s32.totalorder %s64, %s67
      %p73 = scmp.eq.s32.totalorder %s14, 0
      %p74 = por %p72, %p73
      %p75 = scmp.ne.s32.totalorder %s64, %s67
      %p76 = scmp.eq.s32.totalorder %s19, 3
      %p77 = por %p75, %p76
      %p78 = scmp.ne.s32.totalorder %s67, %s68
      %p79 = scmp.eq.s32.totalorder %s19, 0
      %p80 = por %p78, %p79
      %p81 = scmp.ne.s32.totalorder %s67, %s68
      %p82 = scmp.eq.s32.totalorder %s20, 3
      %p83 = por %p81, %p82
      %p85 = scmp.ne.s32.totalorder %s68, %s84
      %p86 = scmp.eq.s32.totalorder %s20, 0
      %p87 = por %p85, %p86
      %s88 = ssub.s32 %s21, %s33
      %p89 = scmp.eq.s32.totalorder %s88, 0
      %s91 = sadd.s32 %s90, 1
      %s92 = scalar_select %p89, %s90, %s91
      %p95 = pneg %p89
      %p96 = scmp.eq.s32.totalorder %s14, 3
      %p97 = por %p95, %p96
      %p98 = scmp.ne.s32.totalorder %s90, %s93
      %p99 = scmp.eq.s32.totalorder %s14, 0
      %p100 = por %p98, %p99
      %p101 = scmp.ne.s32.totalorder %s90, %s93
      %p102 = scmp.eq.s32.totalorder %s19, 3
      %p103 = por %p101, %p102
      %p104 = scmp.ne.s32.totalorder %s93, %s94
      %p105 = scmp.eq.s32.totalorder %s19, 0
      %p106 = por %p104, %p105
      %p107 = scmp.ne.s32.totalorder %s93, %s94
      %p108 = scmp.eq.s32.totalorder %s20, 3
      %p109 = por %p107, %p108
      %p111 = scmp.ne.s32.totalorder %s94, %s110
      %p112 = scmp.eq.s32.totalorder %s20, 0
      %p113 = por %p111, %p112
      %p114 = scmp.le.s32.totalorder 1, %s14
      %p115 = scmp.lt.s32.totalorder %s14, 5
      %p116 = pnand %p114, %p115
      %p117 = pneg %p116
      // Predicated region
      $region9: #{tpu_custom_call.1} parent=5 // pred_check
        _
      $region10: #{tpu_custom_call.1} parent=5 // pred_check_branch
        %119 = sbr.rel (%p116) target = $region12
      $region11: #{tpu_custom_call.1} parent=5 // pred_region
        %s120 = ssub.s32 %s14, 1
      $region12: #{tpu_custom_call.1} parent=5 // pred_fallthru
        _
      %p121 = scmp.lt.s32.totalorder %s14, 4
      // Predicated region
      $region13: #{tpu_custom_call.1} parent=5 // pred_check
        %p122 = pneg %p121
      $region14: #{tpu_custom_call.1} parent=5 // pred_check_branch
        %124 = sbr.rel (%p122) target = $region16
      $region15: #{tpu_custom_call.1} parent=5 // pred_region
        // Predicated region
        $region17: #{tpu_custom_call.1} parent=15 // pred_check
          %p125 = pneg %p48
        $region18: #{tpu_custom_call.1} parent=15 // pred_check_branch
          %127 = sbr.rel (%p125) target = $region20
        $region19: #{tpu_custom_call.1} parent=15 // pred_region
          %s128 = sand.u32 %s38, 1
          %s129 = scalar_lea.sflag [#allocation8], %s128
          %s130 = sand.u32 %s38, 1
          %s131 = smul.addr %s130, 128
          %s132 = scalar_lea.vmem [#allocation7], %s131
          %s133 = smul.u32 16, %s21
          %s135 = ssub.s32 2048, 2048
          %136 = vsyncadd %s129, %s135
          %s137 = smul.addr %s133, 2
          %s138 = sadd.s32 %s22, %s137
          %s139 = smul.addr %s138, 128
          %s140 = scalar_lea.hbm %s0, %s139
          %s141 = sshll.u32 %s132, 4
          %s142 = int_to_ptr.vmem [resolvable:$true] %s141
          %147 = dma.hbm_to_vmem [thread:$0]  %s140, 2048, %s142, %s129, 256, 128, 8
        $region20: #{tpu_custom_call.1} parent=15 // pred_fallthru
          _
        // Predicated region
        $region21: #{tpu_custom_call.1} parent=15 // pred_check
          %p148 = pneg %p74
        $region22: #{tpu_custom_call.1} parent=15 // pred_check_branch
          %150 = sbr.rel (%p148) target = $region24
        $region23: #{tpu_custom_call.1} parent=15 // pred_region
          %s151 = smul.u32 16, %s21
          %p152 = scmp.lt.s32.totalorder %s151, 31
          %s153 = scalar_select %p152, %s151, 31
          %s154 = smul.addr %s153, 8
          %s155 = scalar_lea.vmem %s1, %s154
          %s156 = smul.u32 16, %s21
        $region24: #{tpu_custom_call.1} parent=15 // pred_fallthru
          _
      $region16: #{tpu_custom_call.1} parent=5 // pred_fallthru
        _
      %p157 = scmp.le.s32.totalorder 1, %s14
      %p158 = scmp.lt.s32.totalorder %s14, 5
      %p159 = pnand %p157, %p158
      %p160 = pneg %p159
      // Predicated region
      $region25: #{tpu_custom_call.1} parent=5 // pred_check
        _
      $region26: #{tpu_custom_call.1} parent=5 // pred_check_branch
        %162 = sbr.rel (%p159) target = $region28
      $region27: #{tpu_custom_call.1} parent=5 // pred_region
        %s163 = ssub.s32 %s14, 1
        %s164 = sand.u32 %s41, 1
        %s165 = scalar_lea.sflag [#allocation8], %s164
        %s166 = sand.u32 %s41, 1
        %s167 = smul.addr %s166, 128
        %s168 = scalar_lea.vmem [#allocation7], %s167
        // Predicated region
        $region29: #{tpu_custom_call.1} parent=27 // pred_check
          %p169 = pneg %p54
        $region30: #{tpu_custom_call.1} parent=27 // pred_check_branch
          %171 = sbr.rel (%p169) target = $region32
        $region31: #{tpu_custom_call.1} parent=27 // pred_region
          %172 = dma.done %s165, 2048
        $region32: #{tpu_custom_call.1} parent=27 // pred_fallthru
          _
        %s173 = sand.u32 %s41, 1
        %s174 = scalar_lea.sflag [#allocation8], %s173
        %s175 = sand.u32 %s41, 1
        %s176 = smul.addr %s175, 128
        %s177 = scalar_lea.vmem [#allocation7], %s176
        %p178 = pneg %p54
        %p179 = pneg %p51
        %s180 = smul.u32 16, %s23
        %p181 = scmp.lt.s32.totalorder %s180, 31
        %s182 = scalar_select %p181, %s180, 31
        %s183 = smul.addr %s182, 8
        %s184 = scalar_lea.vmem %s1, %s183
        %p185 = pneg %p80
        %p186 = pneg %p77
        %p187 = pneg %p106
        %p188 = pneg %p103
        %s189 = sand.u32 %s93, 1
        %s190 = scalar_lea.sflag [#allocation9], %s189
        %s191 = sand.u32 %s93, 1
        %s192 = scalar_lea.vmem [#allocation10], %s191
        %s193 = smul.u32 16, %s23
        %s194 = smul.u32 16, %s23
        %p195 = scmp.lt.s32.totalorder %s194, 31
        %s196 = scalar_select %p195, %s194, 31
        %s197 = smul.addr %s196, 8
        %s198 = scalar_lea.vmem %s1, %s197
        %s199 = smul.u32 16, %s23
        %v200 = vld [vmem:[%s168] sm:$0xff]
        %v201 = vld [vmem:[%s168 + $0x8] sm:$0xff]
        %v202 = vld [vmem:[%s168 + $0x10] sm:$0xff]
        %v203 = vld [vmem:[%s168 + $0x18] sm:$0xff]
        %v204 = vld [vmem:[%s168 + $0x20] sm:$0xff]
        %v205 = vld [vmem:[%s168 + $0x28] sm:$0xff]
        %v206 = vld [vmem:[%s168 + $0x30] sm:$0xff]
        %v207 = vld [vmem:[%s168 + $0x38] sm:$0xff]
        %v208 = vld [vmem:[%s168 + $0x40] sm:$0xff]
        %v209 = vld [vmem:[%s168 + $0x48] sm:$0xff]
        %v210 = vld [vmem:[%s168 + $0x50] sm:$0xff]
        %v211 = vld [vmem:[%s168 + $0x58] sm:$0xff]
        %v212 = vld [vmem:[%s168 + $0x60] sm:$0xff]
        %v213 = vld [vmem:[%s168 + $0x68] sm:$0xff]
        %v214 = vld [vmem:[%s168 + $0x70] sm:$0xff]
        %v215 = vld [vmem:[%s168 + $0x78] sm:$0xff]
        %v216 = vld [vmem:[%s198] sm:$0xff]
        %v217 = vld [vmem:[%s198 + $0x8] sm:$0xff]
        %v218 = vld [vmem:[%s198 + $0x10] sm:$0xff]
        %v219 = vld [vmem:[%s198 + $0x18] sm:$0xff]
        %v220 = vld [vmem:[%s198 + $0x20] sm:$0xff]
        %v221 = vld [vmem:[%s198 + $0x28] sm:$0xff]
        %v222 = vld [vmem:[%s198 + $0x30] sm:$0xff]
        %v223 = vld [vmem:[%s198 + $0x38] sm:$0xff]
        %v224 = vld [vmem:[%s198 + $0x40] sm:$0xff]
        %v225 = vld [vmem:[%s198 + $0x48] sm:$0xff]
        %v226 = vld [vmem:[%s198 + $0x50] sm:$0xff]
        %v227 = vld [vmem:[%s198 + $0x58] sm:$0xff]
        %v228 = vld [vmem:[%s198 + $0x60] sm:$0xff]
        %v229 = vld [vmem:[%s198 + $0x68] sm:$0xff]
        %v230 = vld [vmem:[%s198 + $0x70] sm:$0xff]
        %v231 = vld [vmem:[%s198 + $0x78] sm:$0xff]
        %v232 = vlaneseq
        %v233 = vand.u32 %v232, 127
        %p234 = scmp.eq.s32.totalorder %s24, 0
        // Predicated region
        $region33: #{tpu_custom_call.1} parent=27 // pred_check
          %p235 = pneg %p234
        $region34: #{tpu_custom_call.1} parent=27 // pred_check_branch
          %237 = sbr.rel (%p235) target = $region36
        $region35: #{tpu_custom_call.1} parent=27 // pred_region
          %vm238 = vcmp.ge.s32.totalorder %v216, 256
          %vm239 = vcmp.ge.s32.totalorder %v217, 256
          %vm240 = vcmp.ge.s32.totalorder %v218, 256
          %vm241 = vcmp.ge.s32.totalorder %v219, 256
          %vm242 = vcmp.ge.s32.totalorder %v220, 256
          %vm243 = vcmp.ge.s32.totalorder %v221, 256
          %vm244 = vcmp.ge.s32.totalorder %v222, 256
          %vm245 = vcmp.ge.s32.totalorder %v223, 256
          %vm246 = vcmp.ge.s32.totalorder %v224, 256
          %vm247 = vcmp.ge.s32.totalorder %v225, 256
          %vm248 = vcmp.ge.s32.totalorder %v226, 256
          %vm249 = vcmp.ge.s32.totalorder %v227, 256
          %vm250 = vcmp.ge.s32.totalorder %v228, 256
          %vm251 = vcmp.ge.s32.totalorder %v229, 256
          %vm252 = vcmp.ge.s32.totalorder %v230, 256
          %vm253 = vcmp.ge.s32.totalorder %v231, 256
          %v254 = vsel %vm238, 1, 0
          %v255 = vsel %vm239, 1, 0
          %v256 = vsel %vm240, 1, 0
          %v257 = vsel %vm241, 1, 0
          %v258 = vsel %vm242, 1, 0
          %v259 = vsel %vm243, 1, 0
          %v260 = vsel %vm244, 1, 0
          %v261 = vsel %vm245, 1, 0
          %v262 = vsel %vm246, 1, 0
          %v263 = vsel %vm247, 1, 0
          %v264 = vsel %vm248, 1, 0
          %v265 = vsel %vm249, 1, 0
          %v266 = vsel %vm250, 1, 0
          %v267 = vsel %vm251, 1, 0
          %v268 = vsel %vm252, 1, 0
          %v269 = vsel %vm253, 1, 0
          %v270 = vcvt.s32.f32 %v254
          %v271 = vcvt.s32.f32 %v255
          %v272 = vcvt.s32.f32 %v256
          %v273 = vcvt.s32.f32 %v257
          %v274 = vcvt.s32.f32 %v258
          %v275 = vcvt.s32.f32 %v259
          %v276 = vcvt.s32.f32 %v260
          %v277 = vcvt.s32.f32 %v261
          %v278 = vcvt.s32.f32 %v262
          %v279 = vcvt.s32.f32 %v263
          %v280 = vcvt.s32.f32 %v264
          %v281 = vcvt.s32.f32 %v265
          %v282 = vcvt.s32.f32 %v266
          %v283 = vcvt.s32.f32 %v267
          %v284 = vcvt.s32.f32 %v268
          %v285 = vcvt.s32.f32 %v269
          %vm286 = vcmask 64512
          %v287 = vsel %vm286, %v270, 0.0
          %288 = vadd.xlane.f32.xlu0 %v287
          %v289 = vpop.xlane.xlu0 %288
          %v290 = vsel %vm286, %v271, 0.0
          %291 = vadd.xlane.f32.xlu0 %v290
          %v292 = vpop.xlane.xlu0 %291
          %v293 = vsel %vm286, %v272, 0.0
          %294 = vadd.xlane.f32.xlu0 %v293
          %v295 = vpop.xlane.xlu0 %294
          %v296 = vsel %vm286, %v273, 0.0
          %297 = vadd.xlane.f32.xlu0 %v296
          %v298 = vpop.xlane.xlu0 %297
          %v299 = vsel %vm286, %v274, 0.0
          %300 = vadd.xlane.f32.xlu0 %v299
          %v301 = vpop.xlane.xlu0 %300
          %v302 = vsel %vm286, %v275, 0.0
          %303 = vadd.xlane.f32.xlu0 %v302
          %v304 = vpop.xlane.xlu0 %303
          %v305 = vsel %vm286, %v276, 0.0
          %306 = vadd.xlane.f32.xlu0 %v305
          %v307 = vpop.xlane.xlu0 %306
          %v308 = vsel %vm286, %v277, 0.0
          %309 = vadd.xlane.f32.xlu0 %v308
          %v310 = vpop.xlane.xlu0 %309
          %v311 = vsel %vm286, %v278, 0.0
          %312 = vadd.xlane.f32.xlu0 %v311
          %v313 = vpop.xlane.xlu0 %312
          %v314 = vsel %vm286, %v279, 0.0
          %315 = vadd.xlane.f32.xlu0 %v314
          %v316 = vpop.xlane.xlu0 %315
          %v317 = vsel %vm286, %v280, 0.0
          %318 = vadd.xlane.f32.xlu0 %v317
          %v319 = vpop.xlane.xlu0 %318
          %v320 = vsel %vm286, %v281, 0.0
          %321 = vadd.xlane.f32.xlu0 %v320
          %v322 = vpop.xlane.xlu0 %321
          %v323 = vsel %vm286, %v282, 0.0
          %324 = vadd.xlane.f32.xlu0 %v323
          %v325 = vpop.xlane.xlu0 %324
          %v326 = vsel %vm286, %v283, 0.0
          %327 = vadd.xlane.f32.xlu0 %v326
          %v328 = vpop.xlane.xlu0 %327
          %v329 = vsel %vm286, %v284, 0.0
          %330 = vadd.xlane.f32.xlu0 %v329
          %v331 = vpop.xlane.xlu0 %330
          %v332 = vsel %vm286, %v285, 0.0
          %333 = vadd.xlane.f32.xlu0 %v332
          %v334 = vpop.xlane.xlu0 %333
          %vm335 = vcmask 7168
          %336 = vst.msk [vmem:[#allocation2] sm:$0xff] %vm335, 0.0
          %337 = vst.msk [vmem:[#allocation2 + $0x8] sm:$0xff] %vm335, 0.0
          %338 = vst.msk [vmem:[#allocation2 + $0x10] sm:$0xff] %vm335, 0.0
          %339 = vst.msk [vmem:[#allocation2 + $0x18] sm:$0xff] %vm335, 0.0
          %340 = vst.msk [vmem:[#allocation2 + $0x20] sm:$0xff] %vm335, 0.0
          %341 = vst.msk [vmem:[#allocation2 + $0x28] sm:$0xff] %vm335, 0.0
          %342 = vst.msk [vmem:[#allocation2 + $0x30] sm:$0xff] %vm335, 0.0
          %343 = vst.msk [vmem:[#allocation2 + $0x38] sm:$0xff] %vm335, 0.0
          %344 = vst.msk [vmem:[#allocation2 + $0x40] sm:$0xff] %vm335, 0.0
          %345 = vst.msk [vmem:[#allocation2 + $0x48] sm:$0xff] %vm335, 0.0
          %346 = vst.msk [vmem:[#allocation2 + $0x50] sm:$0xff] %vm335, 0.0
          %347 = vst.msk [vmem:[#allocation2 + $0x58] sm:$0xff] %vm335, 0.0
          %348 = vst.msk [vmem:[#allocation2 + $0x60] sm:$0xff] %vm335, 0.0
          %349 = vst.msk [vmem:[#allocation2 + $0x68] sm:$0xff] %vm335, 0.0
          %350 = vst.msk [vmem:[#allocation2 + $0x70] sm:$0xff] %vm335, 0.0
          %351 = vst.msk [vmem:[#allocation2 + $0x78] sm:$0xff] %vm335, 0.0
          %352 = vst.msk [vmem:[#allocation3] sm:$0xff] %vm335, 1.0
          %353 = vst.msk [vmem:[#allocation3 + $0x8] sm:$0xff] %vm335, 1.0
          %354 = vst.msk [vmem:[#allocation3 + $0x10] sm:$0xff] %vm335, 1.0
          %355 = vst.msk [vmem:[#allocation3 + $0x18] sm:$0xff] %vm335, 1.0
          %356 = vst.msk [vmem:[#allocation3 + $0x20] sm:$0xff] %vm335, 1.0
          %357 = vst.msk [vmem:[#allocation3 + $0x28] sm:$0xff] %vm335, 1.0
          %358 = vst.msk [vmem:[#allocation3 + $0x30] sm:$0xff] %vm335, 1.0
          %359 = vst.msk [vmem:[#allocation3 + $0x38] sm:$0xff] %vm335, 1.0
          %360 = vst.msk [vmem:[#allocation3 + $0x40] sm:$0xff] %vm335, 1.0
          %361 = vst.msk [vmem:[#allocation3 + $0x48] sm:$0xff] %vm335, 1.0
          %362 = vst.msk [vmem:[#allocation3 + $0x50] sm:$0xff] %vm335, 1.0
          %363 = vst.msk [vmem:[#allocation3 + $0x58] sm:$0xff] %vm335, 1.0
          %364 = vst.msk [vmem:[#allocation3 + $0x60] sm:$0xff] %vm335, 1.0
          %365 = vst.msk [vmem:[#allocation3 + $0x68] sm:$0xff] %vm335, 1.0
          %366 = vst.msk [vmem:[#allocation3 + $0x70] sm:$0xff] %vm335, 1.0
          %367 = vst.msk [vmem:[#allocation3 + $0x78] sm:$0xff] %vm335, 1.0
          %368 = vst.msk [vmem:[#allocation4] sm:$0xff] %vm335, %v289
          %369 = vst.msk [vmem:[#allocation4 + $0x8] sm:$0xff] %vm335, %v292
          %370 = vst.msk [vmem:[#allocation4 + $0x10] sm:$0xff] %vm335, %v295
          %371 = vst.msk [vmem:[#allocation4 + $0x18] sm:$0xff] %vm335, %v298
          %372 = vst.msk [vmem:[#allocation4 + $0x20] sm:$0xff] %vm335, %v301
          %373 = vst.msk [vmem:[#allocation4 + $0x28] sm:$0xff] %vm335, %v304
          %374 = vst.msk [vmem:[#allocation4 + $0x30] sm:$0xff] %vm335, %v307
          %375 = vst.msk [vmem:[#allocation4 + $0x38] sm:$0xff] %vm335, %v310
          %376 = vst.msk [vmem:[#allocation4 + $0x40] sm:$0xff] %vm335, %v313
          %377 = vst.msk [vmem:[#allocation4 + $0x48] sm:$0xff] %vm335, %v316
          %378 = vst.msk [vmem:[#allocation4 + $0x50] sm:$0xff] %vm335, %v319
          %379 = vst.msk [vmem:[#allocation4 + $0x58] sm:$0xff] %vm335, %v322
          %380 = vst.msk [vmem:[#allocation4 + $0x60] sm:$0xff] %vm335, %v325
          %381 = vst.msk [vmem:[#allocation4 + $0x68] sm:$0xff] %vm335, %v328
          %382 = vst.msk [vmem:[#allocation4 + $0x70] sm:$0xff] %vm335, %v331
          %383 = vst.msk [vmem:[#allocation4 + $0x78] sm:$0xff] %vm335, %v334
          %384 = vst.msk [vmem:[#allocation5] sm:$0xff] %vm335, 0.0
          %385 = vst.msk [vmem:[#allocation5 + $0x8] sm:$0xff] %vm335, 0.0
          %386 = vst.msk [vmem:[#allocation5 + $0x10] sm:$0xff] %vm335, 0.0
          %387 = vst.msk [vmem:[#allocation5 + $0x18] sm:$0xff] %vm335, 0.0
          %388 = vst.msk [vmem:[#allocation5 + $0x20] sm:$0xff] %vm335, 0.0
          %389 = vst.msk [vmem:[#allocation5 + $0x28] sm:$0xff] %vm335, 0.0
          %390 = vst.msk [vmem:[#allocation5 + $0x30] sm:$0xff] %vm335, 0.0
          %391 = vst.msk [vmem:[#allocation5 + $0x38] sm:$0xff] %vm335, 0.0
          %392 = vst.msk [vmem:[#allocation5 + $0x40] sm:$0xff] %vm335, 0.0
          %393 = vst.msk [vmem:[#allocation5 + $0x48] sm:$0xff] %vm335, 0.0
          %394 = vst.msk [vmem:[#allocation5 + $0x50] sm:$0xff] %vm335, 0.0
          %395 = vst.msk [vmem:[#allocation5 + $0x58] sm:$0xff] %vm335, 0.0
          %396 = vst.msk [vmem:[#allocation5 + $0x60] sm:$0xff] %vm335, 0.0
          %397 = vst.msk [vmem:[#allocation5 + $0x68] sm:$0xff] %vm335, 0.0
          %398 = vst.msk [vmem:[#allocation5 + $0x70] sm:$0xff] %vm335, 0.0
          %399 = vst.msk [vmem:[#allocation5 + $0x78] sm:$0xff] %vm335, 0.0
          %v400 = vadd.f32 %v289, 1.0
          %v401 = vadd.f32 %v292, 1.0
          %v402 = vadd.f32 %v295, 1.0
          %v403 = vadd.f32 %v298, 1.0
          %v404 = vadd.f32 %v301, 1.0
          %v405 = vadd.f32 %v304, 1.0
          %v406 = vadd.f32 %v307, 1.0
          %v407 = vadd.f32 %v310, 1.0
          %v408 = vadd.f32 %v313, 1.0
          %v409 = vadd.f32 %v316, 1.0
          %v410 = vadd.f32 %v319, 1.0
          %v411 = vadd.f32 %v322, 1.0
          %v412 = vadd.f32 %v325, 1.0
          %v413 = vadd.f32 %v328, 1.0
          %v414 = vadd.f32 %v331, 1.0
          %v415 = vadd.f32 %v334, 1.0
          %416 = vst.msk [vmem:[#allocation6] sm:$0xff] %vm335, %v400
          %417 = vst.msk [vmem:[#allocation6 + $0x8] sm:$0xff] %vm335, %v401
          %418 = vst.msk [vmem:[#allocation6 + $0x10] sm:$0xff] %vm335, %v402
          %419 = vst.msk [vmem:[#allocation6 + $0x18] sm:$0xff] %vm335, %v403
          %420 = vst.msk [vmem:[#allocation6 + $0x20] sm:$0xff] %vm335, %v404
          %421 = vst.msk [vmem:[#allocation6 + $0x28] sm:$0xff] %vm335, %v405
          %422 = vst.msk [vmem:[#allocation6 + $0x30] sm:$0xff] %vm335, %v406
          %423 = vst.msk [vmem:[#allocation6 + $0x38] sm:$0xff] %vm335, %v407
          %424 = vst.msk [vmem:[#allocation6 + $0x40] sm:$0xff] %vm335, %v408
          %425 = vst.msk [vmem:[#allocation6 + $0x48] sm:$0xff] %vm335, %v409
          %426 = vst.msk [vmem:[#allocation6 + $0x50] sm:$0xff] %vm335, %v410
          %427 = vst.msk [vmem:[#allocation6 + $0x58] sm:$0xff] %vm335, %v411
          %428 = vst.msk [vmem:[#allocation6 + $0x60] sm:$0xff] %vm335, %v412
          %429 = vst.msk [vmem:[#allocation6 + $0x68] sm:$0xff] %vm335, %v413
          %430 = vst.msk [vmem:[#allocation6 + $0x70] sm:$0xff] %vm335, %v414
          %431 = vst.msk [vmem:[#allocation6 + $0x78] sm:$0xff] %vm335, %v415
        $region36: #{tpu_custom_call.1} parent=27 // pred_fallthru
          _
        %s432 = smul.u32 %s24, 128
        %v433 = vstv %s432
        %v434 = vsub.s32 %v216, %v433
        %v435 = vsub.s32 %v217, %v433
        %v436 = vsub.s32 %v218, %v433
        %v437 = vsub.s32 %v219, %v433
        %v438 = vsub.s32 %v220, %v433
        %v439 = vsub.s32 %v221, %v433
        %v440 = vsub.s32 %v222, %v433
        %v441 = vsub.s32 %v223, %v433
        %v442 = vsub.s32 %v224, %v433
        %v443 = vsub.s32 %v225, %v433
        %v444 = vsub.s32 %v226, %v433
        %v445 = vsub.s32 %v227, %v433
        %v446 = vsub.s32 %v228, %v433
        %v447 = vsub.s32 %v229, %v433
        %v448 = vsub.s32 %v230, %v433
        %v449 = vsub.s32 %v231, %v433
        %450 = vset.pattern.permute.xlu0 0
        %451 = vperm.xlu0 %450, %v434
        %v452 = vpop.permute.xlu0 %451
        %453 = vset.pattern.permute.xlu0 0
        %454 = vperm.xlu0 %453, %v435
        %v455 = vpop.permute.xlu0 %454
        %456 = vset.pattern.permute.xlu0 0
        %457 = vperm.xlu0 %456, %v436
        %v458 = vpop.permute.xlu0 %457
        %459 = vset.pattern.permute.xlu0 0
        %460 = vperm.xlu0 %459, %v437
        %v461 = vpop.permute.xlu0 %460
        %462 = vset.pattern.permute.xlu0 0
        %463 = vperm.xlu0 %462, %v438
        %v464 = vpop.permute.xlu0 %463
        %465 = vset.pattern.permute.xlu0 0
        %466 = vperm.xlu0 %465, %v439
        %v467 = vpop.permute.xlu0 %466
        %468 = vset.pattern.permute.xlu0 0
        %469 = vperm.xlu0 %468, %v440
        %v470 = vpop.permute.xlu0 %469
        %471 = vset.pattern.permute.xlu0 0
        %472 = vperm.xlu0 %471, %v441
        %v473 = vpop.permute.xlu0 %472
        %474 = vset.pattern.permute.xlu0 0
        %475 = vperm.xlu0 %474, %v442
        %v476 = vpop.permute.xlu0 %475
        %477 = vset.pattern.permute.xlu0 0
        %478 = vperm.xlu0 %477, %v443
        %v479 = vpop.permute.xlu0 %478
        %480 = vset.pattern.permute.xlu0 0
        %481 = vperm.xlu0 %480, %v444
        %v482 = vpop.permute.xlu0 %481
        %483 = vset.pattern.permute.xlu0 0
        %484 = vperm.xlu0 %483, %v445
        %v485 = vpop.permute.xlu0 %484
        %486 = vset.pattern.permute.xlu0 0
        %487 = vperm.xlu0 %486, %v446
        %v488 = vpop.permute.xlu0 %487
        %489 = vset.pattern.permute.xlu0 0
        %490 = vperm.xlu0 %489, %v447
        %v491 = vpop.permute.xlu0 %490
        %492 = vset.pattern.permute.xlu0 0
        %493 = vperm.xlu0 %492, %v448
        %v494 = vpop.permute.xlu0 %493
        %495 = vset.pattern.permute.xlu0 0
        %496 = vperm.xlu0 %495, %v449
        %v497 = vpop.permute.xlu0 %496
        %vm498 = vcmp.eq.s32.totalorder %v233, %v452
        %vm499 = vcmp.eq.s32.totalorder %v233, %v455
        %vm500 = vcmp.eq.s32.totalorder %v233, %v458
        %vm501 = vcmp.eq.s32.totalorder %v233, %v461
        %vm502 = vcmp.eq.s32.totalorder %v233, %v464
        %vm503 = vcmp.eq.s32.totalorder %v233, %v467
        %vm504 = vcmp.eq.s32.totalorder %v233, %v470
        %vm505 = vcmp.eq.s32.totalorder %v233, %v473
        %vm506 = vcmp.eq.s32.totalorder %v233, %v476
        %vm507 = vcmp.eq.s32.totalorder %v233, %v479
        %vm508 = vcmp.eq.s32.totalorder %v233, %v482
        %vm509 = vcmp.eq.s32.totalorder %v233, %v485
        %vm510 = vcmp.eq.s32.totalorder %v233, %v488
        %vm511 = vcmp.eq.s32.totalorder %v233, %v491
        %vm512 = vcmp.eq.s32.totalorder %v233, %v494
        %vm513 = vcmp.eq.s32.totalorder %v233, %v497
        %v514 = vsel %vm498, 1, 0
        %v515 = vsel %vm499, 1, 0
        %v516 = vsel %vm500, 1, 0
        %v517 = vsel %vm501, 1, 0
        %v518 = vsel %vm502, 1, 0
        %v519 = vsel %vm503, 1, 0
        %v520 = vsel %vm504, 1, 0
        %v521 = vsel %vm505, 1, 0
        %v522 = vsel %vm506, 1, 0
        %v523 = vsel %vm507, 1, 0
        %v524 = vsel %vm508, 1, 0
        %v525 = vsel %vm509, 1, 0
        %v526 = vsel %vm510, 1, 0
        %v527 = vsel %vm511, 1, 0
        %v528 = vsel %vm512, 1, 0
        %v529 = vsel %vm513, 1, 0
        %v530 = vcvt.s32.f32 %v514
        %v531 = vcvt.s32.f32 %v515
        %v532 = vcvt.s32.f32 %v516
        %v533 = vcvt.s32.f32 %v517
        %v534 = vcvt.s32.f32 %v518
        %v535 = vcvt.s32.f32 %v519
        %v536 = vcvt.s32.f32 %v520
        %v537 = vcvt.s32.f32 %v521
        %v538 = vcvt.s32.f32 %v522
        %v539 = vcvt.s32.f32 %v523
        %v540 = vcvt.s32.f32 %v524
        %v541 = vcvt.s32.f32 %v525
        %v542 = vcvt.s32.f32 %v526
        %v543 = vcvt.s32.f32 %v527
        %v544 = vcvt.s32.f32 %v528
        %v545 = vcvt.s32.f32 %v529
        %v546 = vadd.f32 %v530, 0.0
        %v547 = vadd.f32 %v531, 0.0
        %v548 = vadd.f32 %v532, 0.0
        %v549 = vadd.f32 %v533, 0.0
        %v550 = vadd.f32 %v534, 0.0
        %v551 = vadd.f32 %v535, 0.0
        %v552 = vadd.f32 %v536, 0.0
        %v553 = vadd.f32 %v537, 0.0
        %v554 = vadd.f32 %v538, 0.0
        %v555 = vadd.f32 %v539, 0.0
        %v556 = vadd.f32 %v540, 0.0
        %v557 = vadd.f32 %v541, 0.0
        %v558 = vadd.f32 %v542, 0.0
        %v559 = vadd.f32 %v543, 0.0
        %v560 = vadd.f32 %v544, 0.0
        %v561 = vadd.f32 %v545, 0.0
        %562 = vset.pattern.permute.xlu0 1
        %563 = vperm.xlu0 %562, %v434
        %v564 = vpop.permute.xlu0 %563
        %565 = vset.pattern.permute.xlu0 1
        %566 = vperm.xlu0 %565, %v435
        %v567 = vpop.permute.xlu0 %566
        %568 = vset.pattern.permute.xlu0 1
        %569 = vperm.xlu0 %568, %v436
        %v570 = vpop.permute.xlu0 %569
        %571 = vset.pattern.permute.xlu0 1
        %572 = vperm.xlu0 %571, %v437
        %v573 = vpop.permute.xlu0 %572
        %574 = vset.pattern.permute.xlu0 1
        %575 = vperm.xlu0 %574, %v438
        %v576 = vpop.permute.xlu0 %575
        %577 = vset.pattern.permute.xlu0 1
        %578 = vperm.xlu0 %577, %v439
        %v579 = vpop.permute.xlu0 %578
        %580 = vset.pattern.permute.xlu0 1
        %581 = vperm.xlu0 %580, %v440
        %v582 = vpop.permute.xlu0 %581
        %583 = vset.pattern.permute.xlu0 1
        %584 = vperm.xlu0 %583, %v441
        %v585 = vpop.permute.xlu0 %584
        %586 = vset.pattern.permute.xlu0 1
        %587 = vperm.xlu0 %586, %v442
        %v588 = vpop.permute.xlu0 %587
        %589 = vset.pattern.permute.xlu0 1
        %590 = vperm.xlu0 %589, %v443
        %v591 = vpop.permute.xlu0 %590
        %592 = vset.pattern.permute.xlu0 1
        %593 = vperm.xlu0 %592, %v444
        %v594 = vpop.permute.xlu0 %593
        %595 = vset.pattern.permute.xlu0 1
        %596 = vperm.xlu0 %595, %v445
        %v597 = vpop.permute.xlu0 %596
        %598 = vset.pattern.permute.xlu0 1
        %599 = vperm.xlu0 %598, %v446
        %v600 = vpop.permute.xlu0 %599
        %601 = vset.pattern.permute.xlu0 1
        %602 = vperm.xlu0 %601, %v447
        %v603 = vpop.permute.xlu0 %602
        %604 = vset.pattern.permute.xlu0 1
        %605 = vperm.xlu0 %604, %v448
        %v606 = vpop.permute.xlu0 %605
        %607 = vset.pattern.permute.xlu0 1
        %608 = vperm.xlu0 %607, %v449
        %v609 = vpop.permute.xlu0 %608
        %vm610 = vcmp.eq.s32.totalorder %v233, %v564
        %vm611 = vcmp.eq.s32.totalorder %v233, %v567
        %vm612 = vcmp.eq.s32.totalorder %v233, %v570
        %vm613 = vcmp.eq.s32.totalorder %v233, %v573
        %vm614 = vcmp.eq.s32.totalorder %v233, %v576
        %vm615 = vcmp.eq.s32.totalorder %v233, %v579
        %vm616 = vcmp.eq.s32.totalorder %v233, %v582
        %vm617 = vcmp.eq.s32.totalorder %v233, %v585
        %vm618 = vcmp.eq.s32.totalorder %v233, %v588
        %vm619 = vcmp.eq.s32.totalorder %v233, %v591
        %vm620 = vcmp.eq.s32.totalorder %v233, %v594
        %vm621 = vcmp.eq.s32.totalorder %v233, %v597
        %vm622 = vcmp.eq.s32.totalorder %v233, %v600
        %vm623 = vcmp.eq.s32.totalorder %v233, %v603
        %vm624 = vcmp.eq.s32.totalorder %v233, %v606
        %vm625 = vcmp.eq.s32.totalorder %v233, %v609
        %v626 = vsel %vm610, 1, 0
        %v627 = vsel %vm611, 1, 0
        %v628 = vsel %vm612, 1, 0
        %v629 = vsel %vm613, 1, 0
        %v630 = vsel %vm614, 1, 0
        %v631 = vsel %vm615, 1, 0
        %v632 = vsel %vm616, 1, 0
        %v633 = vsel %vm617, 1, 0
        %v634 = vsel %vm618, 1, 0
        %v635 = vsel %vm619, 1, 0
        %v636 = vsel %vm620, 1, 0
        %v637 = vsel %vm621, 1, 0
        %v638 = vsel %vm622, 1, 0
        %v639 = vsel %vm623, 1, 0
        %v640 = vsel %vm624, 1, 0
        %v641 = vsel %vm625, 1, 0
        %v642 = vcvt.s32.f32 %v626
        %v643 = vcvt.s32.f32 %v627
        %v644 = vcvt.s32.f32 %v628
        %v645 = vcvt.s32.f32 %v629
        %v646 = vcvt.s32.f32 %v630
        %v647 = vcvt.s32.f32 %v631
        %v648 = vcvt.s32.f32 %v632
        %v649 = vcvt.s32.f32 %v633
        %v650 = vcvt.s32.f32 %v634
        %v651 = vcvt.s32.f32 %v635
        %v652 = vcvt.s32.f32 %v636
        %v653 = vcvt.s32.f32 %v637
        %v654 = vcvt.s32.f32 %v638
        %v655 = vcvt.s32.f32 %v639
        %v656 = vcvt.s32.f32 %v640
        %v657 = vcvt.s32.f32 %v641
        %v658 = vadd.f32 %v546, %v642
        %v659 = vadd.f32 %v547, %v643
        %v660 = vadd.f32 %v548, %v644
        %v661 = vadd.f32 %v549, %v645
        %v662 = vadd.f32 %v550, %v646
        %v663 = vadd.f32 %v551, %v647
        %v664 = vadd.f32 %v552, %v648
        %v665 = vadd.f32 %v553, %v649
        %v666 = vadd.f32 %v554, %v650
        %v667 = vadd.f32 %v555, %v651
        %v668 = vadd.f32 %v556, %v652
        %v669 = vadd.f32 %v557, %v653
        %v670 = vadd.f32 %v558, %v654
        %v671 = vadd.f32 %v559, %v655
        %v672 = vadd.f32 %v560, %v656
        %v673 = vadd.f32 %v561, %v657
        %674 = vset.pattern.permute.xlu0 2
        %675 = vperm.xlu0 %674, %v434
        %v676 = vpop.permute.xlu0 %675
        %677 = vset.pattern.permute.xlu0 2
        %678 = vperm.xlu0 %677, %v435
        %v679 = vpop.permute.xlu0 %678
        %680 = vset.pattern.permute.xlu0 2
        %681 = vperm.xlu0 %680, %v436
        %v682 = vpop.permute.xlu0 %681
        %683 = vset.pattern.permute.xlu0 2
        %684 = vperm.xlu0 %683, %v437
        %v685 = vpop.permute.xlu0 %684
        %686 = vset.pattern.permute.xlu0 2
        %687 = vperm.xlu0 %686, %v438
        %v688 = vpop.permute.xlu0 %687
        %689 = vset.pattern.permute.xlu0 2
        %690 = vperm.xlu0 %689, %v439
        %v691 = vpop.permute.xlu0 %690
        %692 = vset.pattern.permute.xlu0 2
        %693 = vperm.xlu0 %692, %v440
        %v694 = vpop.permute.xlu0 %693
        %695 = vset.pattern.permute.xlu0 2
        %696 = vperm.xlu0 %695, %v441
        %v697 = vpop.permute.xlu0 %696
        %698 = vset.pattern.permute.xlu0 2
        %699 = vperm.xlu0 %698, %v442
        %v700 = vpop.permute.xlu0 %699
        %701 = vset.pattern.permute.xlu0 2
        %702 = vperm.xlu0 %701, %v443
        %v703 = vpop.permute.xlu0 %702
        %704 = vset.pattern.permute.xlu0 2
        %705 = vperm.xlu0 %704, %v444
        %v706 = vpop.permute.xlu0 %705
        %707 = vset.pattern.permute.xlu0 2
        %708 = vperm.xlu0 %707, %v445
        %v709 = vpop.permute.xlu0 %708
        %710 = vset.pattern.permute.xlu0 2
        %711 = vperm.xlu0 %710, %v446
        %v712 = vpop.permute.xlu0 %711
        %713 = vset.pattern.permute.xlu0 2
        %714 = vperm.xlu0 %713, %v447
        %v715 = vpop.permute.xlu0 %714
        %716 = vset.pattern.permute.xlu0 2
        %717 = vperm.xlu0 %716, %v448
        %v718 = vpop.permute.xlu0 %717
        %719 = vset.pattern.permute.xlu0 2
        %720 = vperm.xlu0 %719, %v449
        %v721 = vpop.permute.xlu0 %720
        %vm722 = vcmp.eq.s32.totalorder %v233, %v676
        %vm723 = vcmp.eq.s32.totalorder %v233, %v679
        %vm724 = vcmp.eq.s32.totalorder %v233, %v682
        %vm725 = vcmp.eq.s32.totalorder %v233, %v685
        %vm726 = vcmp.eq.s32.totalorder %v233, %v688
        %vm727 = vcmp.eq.s32.totalorder %v233, %v691
        %vm728 = vcmp.eq.s32.totalorder %v233, %v694
        %vm729 = vcmp.eq.s32.totalorder %v233, %v697
        %vm730 = vcmp.eq.s32.totalorder %v233, %v700
        %vm731 = vcmp.eq.s32.totalorder %v233, %v703
        %vm732 = vcmp.eq.s32.totalorder %v233, %v706
        %vm733 = vcmp.eq.s32.totalorder %v233, %v709
        %vm734 = vcmp.eq.s32.totalorder %v233, %v712
        %vm735 = vcmp.eq.s32.totalorder %v233, %v715
        %vm736 = vcmp.eq.s32.totalorder %v233, %v718
        %vm737 = vcmp.eq.s32.totalorder %v233, %v721
        %v738 = vsel %vm722, 1, 0
        %v739 = vsel %vm723, 1, 0
        %v740 = vsel %vm724, 1, 0
        %v741 = vsel %vm725, 1, 0
        %v742 = vsel %vm726, 1, 0
        %v743 = vsel %vm727, 1, 0
        %v744 = vsel %vm728, 1, 0
        %v745 = vsel %vm729, 1, 0
        %v746 = vsel %vm730, 1, 0
        %v747 = vsel %vm731, 1, 0
        %v748 = vsel %vm732, 1, 0
        %v749 = vsel %vm733, 1, 0
        %v750 = vsel %vm734, 1, 0
        %v751 = vsel %vm735, 1, 0
        %v752 = vsel %vm736, 1, 0
        %v753 = vsel %vm737, 1, 0
        %v754 = vcvt.s32.f32 %v738
        %v755 = vcvt.s32.f32 %v739
        %v756 = vcvt.s32.f32 %v740
        %v757 = vcvt.s32.f32 %v741
        %v758 = vcvt.s32.f32 %v742
        %v759 = vcvt.s32.f32 %v743
        %v760 = vcvt.s32.f32 %v744
        %v761 = vcvt.s32.f32 %v745
        %v762 = vcvt.s32.f32 %v746
        %v763 = vcvt.s32.f32 %v747
        %v764 = vcvt.s32.f32 %v748
        %v765 = vcvt.s32.f32 %v749
        %v766 = vcvt.s32.f32 %v750
        %v767 = vcvt.s32.f32 %v751
        %v768 = vcvt.s32.f32 %v752
        %v769 = vcvt.s32.f32 %v753
        %v770 = vadd.f32 %v658, %v754
        %v771 = vadd.f32 %v659, %v755
        %v772 = vadd.f32 %v660, %v756
        %v773 = vadd.f32 %v661, %v757
        %v774 = vadd.f32 %v662, %v758
        %v775 = vadd.f32 %v663, %v759
        %v776 = vadd.f32 %v664, %v760
        %v777 = vadd.f32 %v665, %v761
        %v778 = vadd.f32 %v666, %v762
        %v779 = vadd.f32 %v667, %v763
        %v780 = vadd.f32 %v668, %v764
        %v781 = vadd.f32 %v669, %v765
        %v782 = vadd.f32 %v670, %v766
        %v783 = vadd.f32 %v671, %v767
        %v784 = vadd.f32 %v672, %v768
        %v785 = vadd.f32 %v673, %v769
        %786 = vset.pattern.permute.xlu0 3
        %787 = vperm.xlu0 %786, %v434
        %v788 = vpop.permute.xlu0 %787
        %789 = vset.pattern.permute.xlu0 3
        %790 = vperm.xlu0 %789, %v435
        %v791 = vpop.permute.xlu0 %790
        %792 = vset.pattern.permute.xlu0 3
        %793 = vperm.xlu0 %792, %v436
        %v794 = vpop.permute.xlu0 %793
        %795 = vset.pattern.permute.xlu0 3
        %796 = vperm.xlu0 %795, %v437
        %v797 = vpop.permute.xlu0 %796
        %798 = vset.pattern.permute.xlu0 3
        %799 = vperm.xlu0 %798, %v438
        %v800 = vpop.permute.xlu0 %799
        %801 = vset.pattern.permute.xlu0 3
        %802 = vperm.xlu0 %801, %v439
        %v803 = vpop.permute.xlu0 %802
        %804 = vset.pattern.permute.xlu0 3
        %805 = vperm.xlu0 %804, %v440
        %v806 = vpop.permute.xlu0 %805
        %807 = vset.pattern.permute.xlu0 3
        %808 = vperm.xlu0 %807, %v441
        %v809 = vpop.permute.xlu0 %808
        %810 = vset.pattern.permute.xlu0 3
        %811 = vperm.xlu0 %810, %v442
        %v812 = vpop.permute.xlu0 %811
        %813 = vset.pattern.permute.xlu0 3
        %814 = vperm.xlu0 %813, %v443
        %v815 = vpop.permute.xlu0 %814
        %816 = vset.pattern.permute.xlu0 3
        %817 = vperm.xlu0 %816, %v444
        %v818 = vpop.permute.xlu0 %817
        %819 = vset.pattern.permute.xlu0 3
        %820 = vperm.xlu0 %819, %v445
        %v821 = vpop.permute.xlu0 %820
        %822 = vset.pattern.permute.xlu0 3
        %823 = vperm.xlu0 %822, %v446
        %v824 = vpop.permute.xlu0 %823
        %825 = vset.pattern.permute.xlu0 3
        %826 = vperm.xlu0 %825, %v447
        %v827 = vpop.permute.xlu0 %826
        %828 = vset.pattern.permute.xlu0 3
        %829 = vperm.xlu0 %828, %v448
        %v830 = vpop.permute.xlu0 %829
        %831 = vset.pattern.permute.xlu0 3
        %832 = vperm.xlu0 %831, %v449
        %v833 = vpop.permute.xlu0 %832
        %vm834 = vcmp.eq.s32.totalorder %v233, %v788
        %vm835 = vcmp.eq.s32.totalorder %v233, %v791
        %vm836 = vcmp.eq.s32.totalorder %v233, %v794
        %vm837 = vcmp.eq.s32.totalorder %v233, %v797
        %vm838 = vcmp.eq.s32.totalorder %v233, %v800
        %vm839 = vcmp.eq.s32.totalorder %v233, %v803
        %vm840 = vcmp.eq.s32.totalorder %v233, %v806
        %vm841 = vcmp.eq.s32.totalorder %v233, %v809
        %vm842 = vcmp.eq.s32.totalorder %v233, %v812
        %vm843 = vcmp.eq.s32.totalorder %v233, %v815
        %vm844 = vcmp.eq.s32.totalorder %v233, %v818
        %vm845 = vcmp.eq.s32.totalorder %v233, %v821
        %vm846 = vcmp.eq.s32.totalorder %v233, %v824
        %vm847 = vcmp.eq.s32.totalorder %v233, %v827
        %vm848 = vcmp.eq.s32.totalorder %v233, %v830
        %vm849 = vcmp.eq.s32.totalorder %v233, %v833
        %v850 = vsel %vm834, 1, 0
        %v851 = vsel %vm835, 1, 0
        %v852 = vsel %vm836, 1, 0
        %v853 = vsel %vm837, 1, 0
        %v854 = vsel %vm838, 1, 0
        %v855 = vsel %vm839, 1, 0
        %v856 = vsel %vm840, 1, 0
        %v857 = vsel %vm841, 1, 0
        %v858 = vsel %vm842, 1, 0
        %v859 = vsel %vm843, 1, 0
        %v860 = vsel %vm844, 1, 0
        %v861 = vsel %vm845, 1, 0
        %v862 = vsel %vm846, 1, 0
        %v863 = vsel %vm847, 1, 0
        %v864 = vsel %vm848, 1, 0
        %v865 = vsel %vm849, 1, 0
        %v866 = vcvt.s32.f32 %v850
        %v867 = vcvt.s32.f32 %v851
        %v868 = vcvt.s32.f32 %v852
        %v869 = vcvt.s32.f32 %v853
        %v870 = vcvt.s32.f32 %v854
        %v871 = vcvt.s32.f32 %v855
        %v872 = vcvt.s32.f32 %v856
        %v873 = vcvt.s32.f32 %v857
        %v874 = vcvt.s32.f32 %v858
        %v875 = vcvt.s32.f32 %v859
        %v876 = vcvt.s32.f32 %v860
        %v877 = vcvt.s32.f32 %v861
        %v878 = vcvt.s32.f32 %v862
        %v879 = vcvt.s32.f32 %v863
        %v880 = vcvt.s32.f32 %v864
        %v881 = vcvt.s32.f32 %v865
        %v882 = vadd.f32 %v770, %v866
        %v883 = vadd.f32 %v771, %v867
        %v884 = vadd.f32 %v772, %v868
        %v885 = vadd.f32 %v773, %v869
        %v886 = vadd.f32 %v774, %v870
        %v887 = vadd.f32 %v775, %v871
        %v888 = vadd.f32 %v776, %v872
        %v889 = vadd.f32 %v777, %v873
        %v890 = vadd.f32 %v778, %v874
        %v891 = vadd.f32 %v779, %v875
        %v892 = vadd.f32 %v780, %v876
        %v893 = vadd.f32 %v781, %v877
        %v894 = vadd.f32 %v782, %v878
        %v895 = vadd.f32 %v783, %v879
        %v896 = vadd.f32 %v784, %v880
        %v897 = vadd.f32 %v785, %v881
        %898 = vset.pattern.permute.xlu0 4
        %899 = vperm.xlu0 %898, %v434
        %v900 = vpop.permute.xlu0 %899
        %901 = vset.pattern.permute.xlu0 4
        %902 = vperm.xlu0 %901, %v435
        %v903 = vpop.permute.xlu0 %902
        %904 = vset.pattern.permute.xlu0 4
        %905 = vperm.xlu0 %904, %v436
        %v906 = vpop.permute.xlu0 %905
        %907 = vset.pattern.permute.xlu0 4
        %908 = vperm.xlu0 %907, %v437
        %v909 = vpop.permute.xlu0 %908
        %910 = vset.pattern.permute.xlu0 4
        %911 = vperm.xlu0 %910, %v438
        %v912 = vpop.permute.xlu0 %911
        %913 = vset.pattern.permute.xlu0 4
        %914 = vperm.xlu0 %913, %v439
        %v915 = vpop.permute.xlu0 %914
        %916 = vset.pattern.permute.xlu0 4
        %917 = vperm.xlu0 %916, %v440
        %v918 = vpop.permute.xlu0 %917
        %919 = vset.pattern.permute.xlu0 4
        %920 = vperm.xlu0 %919, %v441
        %v921 = vpop.permute.xlu0 %920
        %922 = vset.pattern.permute.xlu0 4
        %923 = vperm.xlu0 %922, %v442
        %v924 = vpop.permute.xlu0 %923
        %925 = vset.pattern.permute.xlu0 4
        %926 = vperm.xlu0 %925, %v443
        %v927 = vpop.permute.xlu0 %926
        %928 = vset.pattern.permute.xlu0 4
        %929 = vperm.xlu0 %928, %v444
        %v930 = vpop.permute.xlu0 %929
        %931 = vset.pattern.permute.xlu0 4
        %932 = vperm.xlu0 %931, %v445
        %v933 = vpop.permute.xlu0 %932
        %934 = vset.pattern.permute.xlu0 4
        %935 = vperm.xlu0 %934, %v446
        %v936 = vpop.permute.xlu0 %935
        %937 = vset.pattern.permute.xlu0 4
        %938 = vperm.xlu0 %937, %v447
        %v939 = vpop.permute.xlu0 %938
        %940 = vset.pattern.permute.xlu0 4
        %941 = vperm.xlu0 %940, %v448
        %v942 = vpop.permute.xlu0 %941
        %943 = vset.pattern.permute.xlu0 4
        %944 = vperm.xlu0 %943, %v449
        %v945 = vpop.permute.xlu0 %944
        %vm946 = vcmp.eq.s32.totalorder %v233, %v900
        %vm947 = vcmp.eq.s32.totalorder %v233, %v903
        %vm948 = vcmp.eq.s32.totalorder %v233, %v906
        %vm949 = vcmp.eq.s32.totalorder %v233, %v909
        %vm950 = vcmp.eq.s32.totalorder %v233, %v912
        %vm951 = vcmp.eq.s32.totalorder %v233, %v915
        %vm952 = vcmp.eq.s32.totalorder %v233, %v918
        %vm953 = vcmp.eq.s32.totalorder %v233, %v921
        %vm954 = vcmp.eq.s32.totalorder %v233, %v924
        %vm955 = vcmp.eq.s32.totalorder %v233, %v927
        %vm956 = vcmp.eq.s32.totalorder %v233, %v930
        %vm957 = vcmp.eq.s32.totalorder %v233, %v933
        %vm958 = vcmp.eq.s32.totalorder %v233, %v936
        %vm959 = vcmp.eq.s32.totalorder %v233, %v939
        %vm960 = vcmp.eq.s32.totalorder %v233, %v942
        %vm961 = vcmp.eq.s32.totalorder %v233, %v945
        %v962 = vsel %vm946, 1, 0
        %v963 = vsel %vm947, 1, 0
        %v964 = vsel %vm948, 1, 0
        %v965 = vsel %vm949, 1, 0
        %v966 = vsel %vm950, 1, 0
        %v967 = vsel %vm951, 1, 0
        %v968 = vsel %vm952, 1, 0
        %v969 = vsel %vm953, 1, 0
        %v970 = vsel %vm954, 1, 0
        %v971 = vsel %vm955, 1, 0
        %v972 = vsel %vm956, 1, 0
        %v973 = vsel %vm957, 1, 0
        %v974 = vsel %vm958, 1, 0
        %v975 = vsel %vm959, 1, 0
        %v976 = vsel %vm960, 1, 0
        %v977 = vsel %vm961, 1, 0
        %v978 = vcvt.s32.f32 %v962
        %v979 = vcvt.s32.f32 %v963
        %v980 = vcvt.s32.f32 %v964
        %v981 = vcvt.s32.f32 %v965
        %v982 = vcvt.s32.f32 %v966
        %v983 = vcvt.s32.f32 %v967
        %v984 = vcvt.s32.f32 %v968
        %v985 = vcvt.s32.f32 %v969
        %v986 = vcvt.s32.f32 %v970
        %v987 = vcvt.s32.f32 %v971
        %v988 = vcvt.s32.f32 %v972
        %v989 = vcvt.s32.f32 %v973
        %v990 = vcvt.s32.f32 %v974
        %v991 = vcvt.s32.f32 %v975
        %v992 = vcvt.s32.f32 %v976
        %v993 = vcvt.s32.f32 %v977
        %v994 = vadd.f32 %v882, %v978
        %v995 = vadd.f32 %v883, %v979
        %v996 = vadd.f32 %v884, %v980
        %v997 = vadd.f32 %v885, %v981
        %v998 = vadd.f32 %v886, %v982
        %v999 = vadd.f32 %v887, %v983
        %v1000 = vadd.f32 %v888, %v984
        %v1001 = vadd.f32 %v889, %v985
        %v1002 = vadd.f32 %v890, %v986
        %v1003 = vadd.f32 %v891, %v987
        %v1004 = vadd.f32 %v892, %v988
        %v1005 = vadd.f32 %v893, %v989
        %v1006 = vadd.f32 %v894, %v990
        %v1007 = vadd.f32 %v895, %v991
        %v1008 = vadd.f32 %v896, %v992
        %v1009 = vadd.f32 %v897, %v993
        %1010 = vset.pattern.permute.xlu0 5
        %1011 = vperm.xlu0 %1010, %v434
        %v1012 = vpop.permute.xlu0 %1011
        %1013 = vset.pattern.permute.xlu0 5
        %1014 = vperm.xlu0 %1013, %v435
        %v1015 = vpop.permute.xlu0 %1014
        %1016 = vset.pattern.permute.xlu0 5
        %1017 = vperm.xlu0 %1016, %v436
        %v1018 = vpop.permute.xlu0 %1017
        %1019 = vset.pattern.permute.xlu0 5
        %1020 = vperm.xlu0 %1019, %v437
        %v1021 = vpop.permute.xlu0 %1020
        %1022 = vset.pattern.permute.xlu0 5
        %1023 = vperm.xlu0 %1022, %v438
        %v1024 = vpop.permute.xlu0 %1023
        %1025 = vset.pattern.permute.xlu0 5
        %1026 = vperm.xlu0 %1025, %v439
        %v1027 = vpop.permute.xlu0 %1026
        %1028 = vset.pattern.permute.xlu0 5
        %1029 = vperm.xlu0 %1028, %v440
        %v1030 = vpop.permute.xlu0 %1029
        %1031 = vset.pattern.permute.xlu0 5
        %1032 = vperm.xlu0 %1031, %v441
        %v1033 = vpop.permute.xlu0 %1032
        %1034 = vset.pattern.permute.xlu0 5
        %1035 = vperm.xlu0 %1034, %v442
        %v1036 = vpop.permute.xlu0 %1035
        %1037 = vset.pattern.permute.xlu0 5
        %1038 = vperm.xlu0 %1037, %v443
        %v1039 = vpop.permute.xlu0 %1038
        %1040 = vset.pattern.permute.xlu0 5
        %1041 = vperm.xlu0 %1040, %v444
        %v1042 = vpop.permute.xlu0 %1041
        %1043 = vset.pattern.permute.xlu0 5
        %1044 = vperm.xlu0 %1043, %v445
        %v1045 = vpop.permute.xlu0 %1044
        %1046 = vset.pattern.permute.xlu0 5
        %1047 = vperm.xlu0 %1046, %v446
        %v1048 = vpop.permute.xlu0 %1047
        %1049 = vset.pattern.permute.xlu0 5
        %1050 = vperm.xlu0 %1049, %v447
        %v1051 = vpop.permute.xlu0 %1050
        %1052 = vset.pattern.permute.xlu0 5
        %1053 = vperm.xlu0 %1052, %v448
        %v1054 = vpop.permute.xlu0 %1053
        %1055 = vset.pattern.permute.xlu0 5
        %1056 = vperm.xlu0 %1055, %v449
        %v1057 = vpop.permute.xlu0 %1056
        %vm1058 = vcmp.eq.s32.totalorder %v233, %v1012
        %vm1059 = vcmp.eq.s32.totalorder %v233, %v1015
        %vm1060 = vcmp.eq.s32.totalorder %v233, %v1018
        %vm1061 = vcmp.eq.s32.totalorder %v233, %v1021
        %vm1062 = vcmp.eq.s32.totalorder %v233, %v1024
        %vm1063 = vcmp.eq.s32.totalorder %v233, %v1027
        %vm1064 = vcmp.eq.s32.totalorder %v233, %v1030
        %vm1065 = vcmp.eq.s32.totalorder %v233, %v1033
        %vm1066 = vcmp.eq.s32.totalorder %v233, %v1036
        %vm1067 = vcmp.eq.s32.totalorder %v233, %v1039
        %vm1068 = vcmp.eq.s32.totalorder %v233, %v1042
        %vm1069 = vcmp.eq.s32.totalorder %v233, %v1045
        %vm1070 = vcmp.eq.s32.totalorder %v233, %v1048
        %vm1071 = vcmp.eq.s32.totalorder %v233, %v1051
        %vm1072 = vcmp.eq.s32.totalorder %v233, %v1054
        %vm1073 = vcmp.eq.s32.totalorder %v233, %v1057
        %v1074 = vsel %vm1058, 1, 0
        %v1075 = vsel %vm1059, 1, 0
        %v1076 = vsel %vm1060, 1, 0
        %v1077 = vsel %vm1061, 1, 0
        %v1078 = vsel %vm1062, 1, 0
        %v1079 = vsel %vm1063, 1, 0
        %v1080 = vsel %vm1064, 1, 0
        %v1081 = vsel %vm1065, 1, 0
        %v1082 = vsel %vm1066, 1, 0
        %v1083 = vsel %vm1067, 1, 0
        %v1084 = vsel %vm1068, 1, 0
        %v1085 = vsel %vm1069, 1, 0
        %v1086 = vsel %vm1070, 1, 0
        %v1087 = vsel %vm1071, 1, 0
        %v1088 = vsel %vm1072, 1, 0
        %v1089 = vsel %vm1073, 1, 0
        %v1090 = vcvt.s32.f32 %v1074
        %v1091 = vcvt.s32.f32 %v1075
        %v1092 = vcvt.s32.f32 %v1076
        %v1093 = vcvt.s32.f32 %v1077
        %v1094 = vcvt.s32.f32 %v1078
        %v1095 = vcvt.s32.f32 %v1079
        %v1096 = vcvt.s32.f32 %v1080
        %v1097 = vcvt.s32.f32 %v1081
        %v1098 = vcvt.s32.f32 %v1082
        %v1099 = vcvt.s32.f32 %v1083
        %v1100 = vcvt.s32.f32 %v1084
        %v1101 = vcvt.s32.f32 %v1085
        %v1102 = vcvt.s32.f32 %v1086
        %v1103 = vcvt.s32.f32 %v1087
        %v1104 = vcvt.s32.f32 %v1088
        %v1105 = vcvt.s32.f32 %v1089
        %v1106 = vadd.f32 %v994, %v1090
        %v1107 = vadd.f32 %v995, %v1091
        %v1108 = vadd.f32 %v996, %v1092
        %v1109 = vadd.f32 %v997, %v1093
        %v1110 = vadd.f32 %v998, %v1094
        %v1111 = vadd.f32 %v999, %v1095
        %v1112 = vadd.f32 %v1000, %v1096
        %v1113 = vadd.f32 %v1001, %v1097
        %v1114 = vadd.f32 %v1002, %v1098
        %v1115 = vadd.f32 %v1003, %v1099
        %v1116 = vadd.f32 %v1004, %v1100
        %v1117 = vadd.f32 %v1005, %v1101
        %v1118 = vadd.f32 %v1006, %v1102
        %v1119 = vadd.f32 %v1007, %v1103
        %v1120 = vadd.f32 %v1008, %v1104
        %v1121 = vadd.f32 %v1009, %v1105
        %1122 = vset.pattern.permute.xlu0 6
        %1123 = vperm.xlu0 %1122, %v434
        %v1124 = vpop.permute.xlu0 %1123
        %1125 = vset.pattern.permute.xlu0 6
        %1126 = vperm.xlu0 %1125, %v435
        %v1127 = vpop.permute.xlu0 %1126
        %1128 = vset.pattern.permute.xlu0 6
        %1129 = vperm.xlu0 %1128, %v436
        %v1130 = vpop.permute.xlu0 %1129
        %1131 = vset.pattern.permute.xlu0 6
        %1132 = vperm.xlu0 %1131, %v437
        %v1133 = vpop.permute.xlu0 %1132
        %1134 = vset.pattern.permute.xlu0 6
        %1135 = vperm.xlu0 %1134, %v438
        %v1136 = vpop.permute.xlu0 %1135
        %1137 = vset.pattern.permute.xlu0 6
        %1138 = vperm.xlu0 %1137, %v439
        %v1139 = vpop.permute.xlu0 %1138
        %1140 = vset.pattern.permute.xlu0 6
        %1141 = vperm.xlu0 %1140, %v440
        %v1142 = vpop.permute.xlu0 %1141
        %1143 = vset.pattern.permute.xlu0 6
        %1144 = vperm.xlu0 %1143, %v441
        %v1145 = vpop.permute.xlu0 %1144
        %1146 = vset.pattern.permute.xlu0 6
        %1147 = vperm.xlu0 %1146, %v442
        %v1148 = vpop.permute.xlu0 %1147
        %1149 = vset.pattern.permute.xlu0 6
        %1150 = vperm.xlu0 %1149, %v443
        %v1151 = vpop.permute.xlu0 %1150
        %1152 = vset.pattern.permute.xlu0 6
        %1153 = vperm.xlu0 %1152, %v444
        %v1154 = vpop.permute.xlu0 %1153
        %1155 = vset.pattern.permute.xlu0 6
        %1156 = vperm.xlu0 %1155, %v445
        %v1157 = vpop.permute.xlu0 %1156
        %1158 = vset.pattern.permute.xlu0 6
        %1159 = vperm.xlu0 %1158, %v446
        %v1160 = vpop.permute.xlu0 %1159
        %1161 = vset.pattern.permute.xlu0 6
        %1162 = vperm.xlu0 %1161, %v447
        %v1163 = vpop.permute.xlu0 %1162
        %1164 = vset.pattern.permute.xlu0 6
        %1165 = vperm.xlu0 %1164, %v448
        %v1166 = vpop.permute.xlu0 %1165
        %1167 = vset.pattern.permute.xlu0 6
        %1168 = vperm.xlu0 %1167, %v449
        %v1169 = vpop.permute.xlu0 %1168
        %vm1170 = vcmp.eq.s32.totalorder %v233, %v1124
        %vm1171 = vcmp.eq.s32.totalorder %v233, %v1127
        %vm1172 = vcmp.eq.s32.totalorder %v233, %v1130
        %vm1173 = vcmp.eq.s32.totalorder %v233, %v1133
        %vm1174 = vcmp.eq.s32.totalorder %v233, %v1136
        %vm1175 = vcmp.eq.s32.totalorder %v233, %v1139
        %vm1176 = vcmp.eq.s32.totalorder %v233, %v1142
        %vm1177 = vcmp.eq.s32.totalorder %v233, %v1145
        %vm1178 = vcmp.eq.s32.totalorder %v233, %v1148
        %vm1179 = vcmp.eq.s32.totalorder %v233, %v1151
        %vm1180 = vcmp.eq.s32.totalorder %v233, %v1154
        %vm1181 = vcmp.eq.s32.totalorder %v233, %v1157
        %vm1182 = vcmp.eq.s32.totalorder %v233, %v1160
        %vm1183 = vcmp.eq.s32.totalorder %v233, %v1163
        %vm1184 = vcmp.eq.s32.totalorder %v233, %v1166
        %vm1185 = vcmp.eq.s32.totalorder %v233, %v1169
        %v1186 = vsel %vm1170, 1, 0
        %v1187 = vsel %vm1171, 1, 0
        %v1188 = vsel %vm1172, 1, 0
        %v1189 = vsel %vm1173, 1, 0
        %v1190 = vsel %vm1174, 1, 0
        %v1191 = vsel %vm1175, 1, 0
        %v1192 = vsel %vm1176, 1, 0
        %v1193 = vsel %vm1177, 1, 0
        %v1194 = vsel %vm1178, 1, 0
        %v1195 = vsel %vm1179, 1, 0
        %v1196 = vsel %vm1180, 1, 0
        %v1197 = vsel %vm1181, 1, 0
        %v1198 = vsel %vm1182, 1, 0
        %v1199 = vsel %vm1183, 1, 0
        %v1200 = vsel %vm1184, 1, 0
        %v1201 = vsel %vm1185, 1, 0
        %v1202 = vcvt.s32.f32 %v1186
        %v1203 = vcvt.s32.f32 %v1187
        %v1204 = vcvt.s32.f32 %v1188
        %v1205 = vcvt.s32.f32 %v1189
        %v1206 = vcvt.s32.f32 %v1190
        %v1207 = vcvt.s32.f32 %v1191
        %v1208 = vcvt.s32.f32 %v1192
        %v1209 = vcvt.s32.f32 %v1193
        %v1210 = vcvt.s32.f32 %v1194
        %v1211 = vcvt.s32.f32 %v1195
        %v1212 = vcvt.s32.f32 %v1196
        %v1213 = vcvt.s32.f32 %v1197
        %v1214 = vcvt.s32.f32 %v1198
        %v1215 = vcvt.s32.f32 %v1199
        %v1216 = vcvt.s32.f32 %v1200
        %v1217 = vcvt.s32.f32 %v1201
        %v1218 = vadd.f32 %v1106, %v1202
        %v1219 = vadd.f32 %v1107, %v1203
        %v1220 = vadd.f32 %v1108, %v1204
        %v1221 = vadd.f32 %v1109, %v1205
        %v1222 = vadd.f32 %v1110, %v1206
        %v1223 = vadd.f32 %v1111, %v1207
        %v1224 = vadd.f32 %v1112, %v1208
        %v1225 = vadd.f32 %v1113, %v1209
        %v1226 = vadd.f32 %v1114, %v1210
        %v1227 = vadd.f32 %v1115, %v1211
        %v1228 = vadd.f32 %v1116, %v1212
        %v1229 = vadd.f32 %v1117, %v1213
        %v1230 = vadd.f32 %v1118, %v1214
        %v1231 = vadd.f32 %v1119, %v1215
        %v1232 = vadd.f32 %v1120, %v1216
        %v1233 = vadd.f32 %v1121, %v1217
        %1234 = vset.pattern.permute.xlu0 7
        %1235 = vperm.xlu0 %1234, %v434
        %v1236 = vpop.permute.xlu0 %1235
        %1237 = vset.pattern.permute.xlu0 7
        %1238 = vperm.xlu0 %1237, %v435
        %v1239 = vpop.permute.xlu0 %1238
        %1240 = vset.pattern.permute.xlu0 7
        %1241 = vperm.xlu0 %1240, %v436
        %v1242 = vpop.permute.xlu0 %1241
        %1243 = vset.pattern.permute.xlu0 7
        %1244 = vperm.xlu0 %1243, %v437
        %v1245 = vpop.permute.xlu0 %1244
        %1246 = vset.pattern.permute.xlu0 7
        %1247 = vperm.xlu0 %1246, %v438
        %v1248 = vpop.permute.xlu0 %1247
        %1249 = vset.pattern.permute.xlu0 7
        %1250 = vperm.xlu0 %1249, %v439
        %v1251 = vpop.permute.xlu0 %1250
        %1252 = vset.pattern.permute.xlu0 7
        %1253 = vperm.xlu0 %1252, %v440
        %v1254 = vpop.permute.xlu0 %1253
        %1255 = vset.pattern.permute.xlu0 7
        %1256 = vperm.xlu0 %1255, %v441
        %v1257 = vpop.permute.xlu0 %1256
        %1258 = vset.pattern.permute.xlu0 7
        %1259 = vperm.xlu0 %1258, %v442
        %v1260 = vpop.permute.xlu0 %1259
        %1261 = vset.pattern.permute.xlu0 7
        %1262 = vperm.xlu0 %1261, %v443
        %v1263 = vpop.permute.xlu0 %1262
        %1264 = vset.pattern.permute.xlu0 7
        %1265 = vperm.xlu0 %1264, %v444
        %v1266 = vpop.permute.xlu0 %1265
        %1267 = vset.pattern.permute.xlu0 7
        %1268 = vperm.xlu0 %1267, %v445
        %v1269 = vpop.permute.xlu0 %1268
        %1270 = vset.pattern.permute.xlu0 7
        %1271 = vperm.xlu0 %1270, %v446
        %v1272 = vpop.permute.xlu0 %1271
        %1273 = vset.pattern.permute.xlu0 7
        %1274 = vperm.xlu0 %1273, %v447
        %v1275 = vpop.permute.xlu0 %1274
        %1276 = vset.pattern.permute.xlu0 7
        %1277 = vperm.xlu0 %1276, %v448
        %v1278 = vpop.permute.xlu0 %1277
        %1279 = vset.pattern.permute.xlu0 7
        %1280 = vperm.xlu0 %1279, %v449
        %v1281 = vpop.permute.xlu0 %1280
        %vm1282 = vcmp.eq.s32.totalorder %v233, %v1236
        %vm1283 = vcmp.eq.s32.totalorder %v233, %v1239
        %vm1284 = vcmp.eq.s32.totalorder %v233, %v1242
        %vm1285 = vcmp.eq.s32.totalorder %v233, %v1245
        %vm1286 = vcmp.eq.s32.totalorder %v233, %v1248
        %vm1287 = vcmp.eq.s32.totalorder %v233, %v1251
        %vm1288 = vcmp.eq.s32.totalorder %v233, %v1254
        %vm1289 = vcmp.eq.s32.totalorder %v233, %v1257
        %vm1290 = vcmp.eq.s32.totalorder %v233, %v1260
        %vm1291 = vcmp.eq.s32.totalorder %v233, %v1263
        %vm1292 = vcmp.eq.s32.totalorder %v233, %v1266
        %vm1293 = vcmp.eq.s32.totalorder %v233, %v1269
        %vm1294 = vcmp.eq.s32.totalorder %v233, %v1272
        %vm1295 = vcmp.eq.s32.totalorder %v233, %v1275
        %vm1296 = vcmp.eq.s32.totalorder %v233, %v1278
        %vm1297 = vcmp.eq.s32.totalorder %v233, %v1281
        %v1298 = vsel %vm1282, 1, 0
        %v1299 = vsel %vm1283, 1, 0
        %v1300 = vsel %vm1284, 1, 0
        %v1301 = vsel %vm1285, 1, 0
        %v1302 = vsel %vm1286, 1, 0
        %v1303 = vsel %vm1287, 1, 0
        %v1304 = vsel %vm1288, 1, 0
        %v1305 = vsel %vm1289, 1, 0
        %v1306 = vsel %vm1290, 1, 0
        %v1307 = vsel %vm1291, 1, 0
        %v1308 = vsel %vm1292, 1, 0
        %v1309 = vsel %vm1293, 1, 0
        %v1310 = vsel %vm1294, 1, 0
        %v1311 = vsel %vm1295, 1, 0
        %v1312 = vsel %vm1296, 1, 0
        %v1313 = vsel %vm1297, 1, 0
        %v1314 = vcvt.s32.f32 %v1298
        %v1315 = vcvt.s32.f32 %v1299
        %v1316 = vcvt.s32.f32 %v1300
        %v1317 = vcvt.s32.f32 %v1301
        %v1318 = vcvt.s32.f32 %v1302
        %v1319 = vcvt.s32.f32 %v1303
        %v1320 = vcvt.s32.f32 %v1304
        %v1321 = vcvt.s32.f32 %v1305
        %v1322 = vcvt.s32.f32 %v1306
        %v1323 = vcvt.s32.f32 %v1307
        %v1324 = vcvt.s32.f32 %v1308
        %v1325 = vcvt.s32.f32 %v1309
        %v1326 = vcvt.s32.f32 %v1310
        %v1327 = vcvt.s32.f32 %v1311
        %v1328 = vcvt.s32.f32 %v1312
        %v1329 = vcvt.s32.f32 %v1313
        %v1330 = vadd.f32 %v1218, %v1314
        %v1331 = vadd.f32 %v1219, %v1315
        %v1332 = vadd.f32 %v1220, %v1316
        %v1333 = vadd.f32 %v1221, %v1317
        %v1334 = vadd.f32 %v1222, %v1318
        %v1335 = vadd.f32 %v1223, %v1319
        %v1336 = vadd.f32 %v1224, %v1320
        %v1337 = vadd.f32 %v1225, %v1321
        %v1338 = vadd.f32 %v1226, %v1322
        %v1339 = vadd.f32 %v1227, %v1323
        %v1340 = vadd.f32 %v1228, %v1324
        %v1341 = vadd.f32 %v1229, %v1325
        %v1342 = vadd.f32 %v1230, %v1326
        %v1343 = vadd.f32 %v1231, %v1327
        %v1344 = vadd.f32 %v1232, %v1328
        %v1345 = vadd.f32 %v1233, %v1329
        %v1346 = vld [vmem:[#allocation2] sm:$0xff]
        %v1347 = vld [vmem:[#allocation2 + $0x8] sm:$0xff]
        %v1348 = vld [vmem:[#allocation2 + $0x10] sm:$0xff]
        %v1349 = vld [vmem:[#allocation2 + $0x18] sm:$0xff]
        %v1350 = vld [vmem:[#allocation2 + $0x20] sm:$0xff]
        %v1351 = vld [vmem:[#allocation2 + $0x28] sm:$0xff]
        %v1352 = vld [vmem:[#allocation2 + $0x30] sm:$0xff]
        %v1353 = vld [vmem:[#allocation2 + $0x38] sm:$0xff]
        %v1354 = vld [vmem:[#allocation2 + $0x40] sm:$0xff]
        %v1355 = vld [vmem:[#allocation2 + $0x48] sm:$0xff]
        %v1356 = vld [vmem:[#allocation2 + $0x50] sm:$0xff]
        %v1357 = vld [vmem:[#allocation2 + $0x58] sm:$0xff]
        %v1358 = vld [vmem:[#allocation2 + $0x60] sm:$0xff]
        %v1359 = vld [vmem:[#allocation2 + $0x68] sm:$0xff]
        %v1360 = vld [vmem:[#allocation2 + $0x70] sm:$0xff]
        %v1361 = vld [vmem:[#allocation2 + $0x78] sm:$0xff]
        %1362 = vmax.xlane.f32.xlu0 %v200
        %v1363 = vpop.xlane.xlu0 %1362
        %1364 = vmax.xlane.f32.xlu0 %v201
        %v1365 = vpop.xlane.xlu0 %1364
        %1366 = vmax.xlane.f32.xlu0 %v202
        %v1367 = vpop.xlane.xlu0 %1366
        %1368 = vmax.xlane.f32.xlu0 %v203
        %v1369 = vpop.xlane.xlu0 %1368
        %1370 = vmax.xlane.f32.xlu0 %v204
        %v1371 = vpop.xlane.xlu0 %1370
        %1372 = vmax.xlane.f32.xlu0 %v205
        %v1373 = vpop.xlane.xlu0 %1372
        %1374 = vmax.xlane.f32.xlu0 %v206
        %v1375 = vpop.xlane.xlu0 %1374
        %1376 = vmax.xlane.f32.xlu0 %v207
        %v1377 = vpop.xlane.xlu0 %1376
        %1378 = vmax.xlane.f32.xlu0 %v208
        %v1379 = vpop.xlane.xlu0 %1378
        %1380 = vmax.xlane.f32.xlu0 %v209
        %v1381 = vpop.xlane.xlu0 %1380
        %1382 = vmax.xlane.f32.xlu0 %v210
        %v1383 = vpop.xlane.xlu0 %1382
        %1384 = vmax.xlane.f32.xlu0 %v211
        %v1385 = vpop.xlane.xlu0 %1384
        %1386 = vmax.xlane.f32.xlu0 %v212
        %v1387 = vpop.xlane.xlu0 %1386
        %1388 = vmax.xlane.f32.xlu0 %v213
        %v1389 = vpop.xlane.xlu0 %1388
        %1390 = vmax.xlane.f32.xlu0 %v214
        %v1391 = vpop.xlane.xlu0 %1390
        %1392 = vmax.xlane.f32.xlu0 %v215
        %v1393 = vpop.xlane.xlu0 %1392
        %v1394 = vmax.f32 %v1346, %v1363
        %v1395 = vmax.f32 %v1347, %v1365
        %v1396 = vmax.f32 %v1348, %v1367
        %v1397 = vmax.f32 %v1349, %v1369
        %v1398 = vmax.f32 %v1350, %v1371
        %v1399 = vmax.f32 %v1351, %v1373
        %v1400 = vmax.f32 %v1352, %v1375
        %v1401 = vmax.f32 %v1353, %v1377
        %v1402 = vmax.f32 %v1354, %v1379
        %v1403 = vmax.f32 %v1355, %v1381
        %v1404 = vmax.f32 %v1356, %v1383
        %v1405 = vmax.f32 %v1357, %v1385
        %v1406 = vmax.f32 %v1358, %v1387
        %v1407 = vmax.f32 %v1359, %v1389
        %v1408 = vmax.f32 %v1360, %v1391
        %v1409 = vmax.f32 %v1361, %v1393
        %v1410 = vsub.f32 %v1346, %v1394
        %v1411 = vsub.f32 %v1347, %v1395
        %v1412 = vsub.f32 %v1348, %v1396
        %v1413 = vsub.f32 %v1349, %v1397
        %v1414 = vsub.f32 %v1350, %v1398
        %v1415 = vsub.f32 %v1351, %v1399
        %v1416 = vsub.f32 %v1352, %v1400
        %v1417 = vsub.f32 %v1353, %v1401
        %v1418 = vsub.f32 %v1354, %v1402
        %v1419 = vsub.f32 %v1355, %v1403
        %v1420 = vsub.f32 %v1356, %v1404
        %v1421 = vsub.f32 %v1357, %v1405
        %v1422 = vsub.f32 %v1358, %v1406
        %v1423 = vsub.f32 %v1359, %v1407
        %v1424 = vsub.f32 %v1360, %v1408
        %v1425 = vsub.f32 %v1361, %v1409
        %v1426 = vmul.f32 %v1410, 1.442695
        %v1427 = vpow.pop %v1426
        %v1428 = vmul.f32 %v1411, 1.442695
        %v1429 = vpow.pop %v1428
        %v1430 = vmul.f32 %v1412, 1.442695
        %v1431 = vpow.pop %v1430
        %v1432 = vmul.f32 %v1413, 1.442695
        %v1433 = vpow.pop %v1432
        %v1434 = vmul.f32 %v1414, 1.442695
        %v1435 = vpow.pop %v1434
        %v1436 = vmul.f32 %v1415, 1.442695
        %v1437 = vpow.pop %v1436
        %v1438 = vmul.f32 %v1416, 1.442695
        %v1439 = vpow.pop %v1438
        %v1440 = vmul.f32 %v1417, 1.442695
        %v1441 = vpow.pop %v1440
        %v1442 = vmul.f32 %v1418, 1.442695
        %v1443 = vpow.pop %v1442
        %v1444 = vmul.f32 %v1419, 1.442695
        %v1445 = vpow.pop %v1444
        %v1446 = vmul.f32 %v1420, 1.442695
        %v1447 = vpow.pop %v1446
        %v1448 = vmul.f32 %v1421, 1.442695
        %v1449 = vpow.pop %v1448
        %v1450 = vmul.f32 %v1422, 1.442695
        %v1451 = vpow.pop %v1450
        %v1452 = vmul.f32 %v1423, 1.442695
        %v1453 = vpow.pop %v1452
        %v1454 = vmul.f32 %v1424, 1.442695
        %v1455 = vpow.pop %v1454
        %v1456 = vmul.f32 %v1425, 1.442695
        %v1457 = vpow.pop %v1456
        %1459 = vset.pattern.permute.xlu0 0
        %1460 = vperm.xlu0 %1459, %v1394
        %v1461 = vpop.permute.xlu0 %1460
        %1464 = vset.pattern.permute.xlu0 0
        %1465 = vperm.xlu0 %1464, %v1395
        %v1466 = vpop.permute.xlu0 %1465
        %1469 = vset.pattern.permute.xlu0 0
        %1470 = vperm.xlu0 %1469, %v1396
        %v1471 = vpop.permute.xlu0 %1470
        %1474 = vset.pattern.permute.xlu0 0
        %1475 = vperm.xlu0 %1474, %v1397
        %v1476 = vpop.permute.xlu0 %1475
        %1479 = vset.pattern.permute.xlu0 0
        %1480 = vperm.xlu0 %1479, %v1398
        %v1481 = vpop.permute.xlu0 %1480
        %1484 = vset.pattern.permute.xlu0 0
        %1485 = vperm.xlu0 %1484, %v1399
        %v1486 = vpop.permute.xlu0 %1485
        %1489 = vset.pattern.permute.xlu0 0
        %1490 = vperm.xlu0 %1489, %v1400
        %v1491 = vpop.permute.xlu0 %1490
        %1494 = vset.pattern.permute.xlu0 0
        %1495 = vperm.xlu0 %1494, %v1401
        %v1496 = vpop.permute.xlu0 %1495
        %1499 = vset.pattern.permute.xlu0 0
        %1500 = vperm.xlu0 %1499, %v1402
        %v1501 = vpop.permute.xlu0 %1500
        %1504 = vset.pattern.permute.xlu0 0
        %1505 = vperm.xlu0 %1504, %v1403
        %v1506 = vpop.permute.xlu0 %1505
        %1509 = vset.pattern.permute.xlu0 0
        %1510 = vperm.xlu0 %1509, %v1404
        %v1511 = vpop.permute.xlu0 %1510
        %1514 = vset.pattern.permute.xlu0 0
        %1515 = vperm.xlu0 %1514, %v1405
        %v1516 = vpop.permute.xlu0 %1515
        %1519 = vset.pattern.permute.xlu0 0
        %1520 = vperm.xlu0 %1519, %v1406
        %v1521 = vpop.permute.xlu0 %1520
        %1524 = vset.pattern.permute.xlu0 0
        %1525 = vperm.xlu0 %1524, %v1407
        %v1526 = vpop.permute.xlu0 %1525
        %1529 = vset.pattern.permute.xlu0 0
        %1530 = vperm.xlu0 %1529, %v1408
        %v1531 = vpop.permute.xlu0 %1530
        %1534 = vset.pattern.permute.xlu0 0
        %1535 = vperm.xlu0 %1534, %v1409
        %v1536 = vpop.permute.xlu0 %1535
        %v1538 = vsub.f32 %v200, %v1461
        %v1539 = vsub.f32 %v201, %v1466
        %v1540 = vsub.f32 %v202, %v1471
        %v1541 = vsub.f32 %v203, %v1476
        %v1542 = vsub.f32 %v204, %v1481
        %v1543 = vsub.f32 %v205, %v1486
        %v1544 = vsub.f32 %v206, %v1491
        %v1545 = vsub.f32 %v207, %v1496
        %v1546 = vsub.f32 %v208, %v1501
        %v1547 = vsub.f32 %v209, %v1506
        %v1548 = vsub.f32 %v210, %v1511
        %v1549 = vsub.f32 %v211, %v1516
        %v1550 = vsub.f32 %v212, %v1521
        %v1551 = vsub.f32 %v213, %v1526
        %v1552 = vsub.f32 %v214, %v1531
        %v1553 = vsub.f32 %v215, %v1536
        %v1554 = vmul.f32 %v1538, 1.442695
        %v1555 = vpow.pop %v1554
        %v1556 = vmul.f32 %v1539, 1.442695
        %v1557 = vpow.pop %v1556
        %v1558 = vmul.f32 %v1540, 1.442695
        %v1559 = vpow.pop %v1558
        %v1560 = vmul.f32 %v1541, 1.442695
        %v1561 = vpow.pop %v1560
        %v1562 = vmul.f32 %v1542, 1.442695
        %v1563 = vpow.pop %v1562
        %v1564 = vmul.f32 %v1543, 1.442695
        %v1565 = vpow.pop %v1564
        %v1566 = vmul.f32 %v1544, 1.442695
        %v1567 = vpow.pop %v1566
        %v1568 = vmul.f32 %v1545, 1.442695
        %v1569 = vpow.pop %v1568
        %v1570 = vmul.f32 %v1546, 1.442695
        %v1571 = vpow.pop %v1570
        %v1572 = vmul.f32 %v1547, 1.442695
        %v1573 = vpow.pop %v1572
        %v1574 = vmul.f32 %v1548, 1.442695
        %v1575 = vpow.pop %v1574
        %v1576 = vmul.f32 %v1549, 1.442695
        %v1577 = vpow.pop %v1576
        %v1578 = vmul.f32 %v1550, 1.442695
        %v1579 = vpow.pop %v1578
        %v1580 = vmul.f32 %v1551, 1.442695
        %v1581 = vpow.pop %v1580
        %v1582 = vmul.f32 %v1552, 1.442695
        %v1583 = vpow.pop %v1582
        %v1584 = vmul.f32 %v1553, 1.442695
        %v1585 = vpow.pop %v1584
        %v1586 = vld [vmem:[#allocation3] sm:$0xff]
        %v1587 = vld [vmem:[#allocation3 + $0x8] sm:$0xff]
        %v1588 = vld [vmem:[#allocation3 + $0x10] sm:$0xff]
        %v1589 = vld [vmem:[#allocation3 + $0x18] sm:$0xff]
        %v1590 = vld [vmem:[#allocation3 + $0x20] sm:$0xff]
        %v1591 = vld [vmem:[#allocation3 + $0x28] sm:$0xff]
        %v1592 = vld [vmem:[#allocation3 + $0x30] sm:$0xff]
        %v1593 = vld [vmem:[#allocation3 + $0x38] sm:$0xff]
        %v1594 = vld [vmem:[#allocation3 + $0x40] sm:$0xff]
        %v1595 = vld [vmem:[#allocation3 + $0x48] sm:$0xff]
        %v1596 = vld [vmem:[#allocation3 + $0x50] sm:$0xff]
        %v1597 = vld [vmem:[#allocation3 + $0x58] sm:$0xff]
        %v1598 = vld [vmem:[#allocation3 + $0x60] sm:$0xff]
        %v1599 = vld [vmem:[#allocation3 + $0x68] sm:$0xff]
        %v1600 = vld [vmem:[#allocation3 + $0x70] sm:$0xff]
        %v1601 = vld [vmem:[#allocation3 + $0x78] sm:$0xff]
        %v1602 = vmul.f32 %v1586, %v1427
        %v1603 = vmul.f32 %v1587, %v1429
        %v1604 = vmul.f32 %v1588, %v1431
        %v1605 = vmul.f32 %v1589, %v1433
        %v1606 = vmul.f32 %v1590, %v1435
        %v1607 = vmul.f32 %v1591, %v1437
        %v1608 = vmul.f32 %v1592, %v1439
        %v1609 = vmul.f32 %v1593, %v1441
        %v1610 = vmul.f32 %v1594, %v1443
        %v1611 = vmul.f32 %v1595, %v1445
        %v1612 = vmul.f32 %v1596, %v1447
        %v1613 = vmul.f32 %v1597, %v1449
        %v1614 = vmul.f32 %v1598, %v1451
        %v1615 = vmul.f32 %v1599, %v1453
        %v1616 = vmul.f32 %v1600, %v1455
        %v1617 = vmul.f32 %v1601, %v1457
        %1618 = vadd.xlane.f32.xlu0 %v1555
        %v1619 = vpop.xlane.xlu0 %1618
        %1620 = vadd.xlane.f32.xlu0 %v1557
        %v1621 = vpop.xlane.xlu0 %1620
        %1622 = vadd.xlane.f32.xlu0 %v1559
        %v1623 = vpop.xlane.xlu0 %1622
        %1624 = vadd.xlane.f32.xlu0 %v1561
        %v1625 = vpop.xlane.xlu0 %1624
        %1626 = vadd.xlane.f32.xlu0 %v1563
        %v1627 = vpop.xlane.xlu0 %1626
        %1628 = vadd.xlane.f32.xlu0 %v1565
        %v1629 = vpop.xlane.xlu0 %1628
        %1630 = vadd.xlane.f32.xlu0 %v1567
        %v1631 = vpop.xlane.xlu0 %1630
        %1632 = vadd.xlane.f32.xlu0 %v1569
        %v1633 = vpop.xlane.xlu0 %1632
        %1634 = vadd.xlane.f32.xlu0 %v1571
        %v1635 = vpop.xlane.xlu0 %1634
        %1636 = vadd.xlane.f32.xlu0 %v1573
        %v1637 = vpop.xlane.xlu0 %1636
        %1638 = vadd.xlane.f32.xlu0 %v1575
        %v1639 = vpop.xlane.xlu0 %1638
        %1640 = vadd.xlane.f32.xlu0 %v1577
        %v1641 = vpop.xlane.xlu0 %1640
        %1642 = vadd.xlane.f32.xlu0 %v1579
        %v1643 = vpop.xlane.xlu0 %1642
        %1644 = vadd.xlane.f32.xlu0 %v1581
        %v1645 = vpop.xlane.xlu0 %1644
        %1646 = vadd.xlane.f32.xlu0 %v1583
        %v1647 = vpop.xlane.xlu0 %1646
        %1648 = vadd.xlane.f32.xlu0 %v1585
        %v1649 = vpop.xlane.xlu0 %1648
        %v1650 = vadd.f32 %v1602, %v1619
        %v1651 = vadd.f32 %v1603, %v1621
        %v1652 = vadd.f32 %v1604, %v1623
        %v1653 = vadd.f32 %v1605, %v1625
        %v1654 = vadd.f32 %v1606, %v1627
        %v1655 = vadd.f32 %v1607, %v1629
        %v1656 = vadd.f32 %v1608, %v1631
        %v1657 = vadd.f32 %v1609, %v1633
        %v1658 = vadd.f32 %v1610, %v1635
        %v1659 = vadd.f32 %v1611, %v1637
        %v1660 = vadd.f32 %v1612, %v1639
        %v1661 = vadd.f32 %v1613, %v1641
        %v1662 = vadd.f32 %v1614, %v1643
        %v1663 = vadd.f32 %v1615, %v1645
        %v1664 = vadd.f32 %v1616, %v1647
        %v1665 = vadd.f32 %v1617, %v1649
        %vm1666 = vcmask 7168
        %1667 = vst.msk [vmem:[#allocation3] sm:$0xff] %vm1666, %v1650
        %1668 = vst.msk [vmem:[#allocation3 + $0x8] sm:$0xff] %vm1666, %v1651
        %1669 = vst.msk [vmem:[#allocation3 + $0x10] sm:$0xff] %vm1666, %v1652
        %1670 = vst.msk [vmem:[#allocation3 + $0x18] sm:$0xff] %vm1666, %v1653
        %1671 = vst.msk [vmem:[#allocation3 + $0x20] sm:$0xff] %vm1666, %v1654
        %1672 = vst.msk [vmem:[#allocation3 + $0x28] sm:$0xff] %vm1666, %v1655
        %1673 = vst.msk [vmem:[#allocation3 + $0x30] sm:$0xff] %vm1666, %v1656
        %1674 = vst.msk [vmem:[#allocation3 + $0x38] sm:$0xff] %vm1666, %v1657
        %1675 = vst.msk [vmem:[#allocation3 + $0x40] sm:$0xff] %vm1666, %v1658
        %1676 = vst.msk [vmem:[#allocation3 + $0x48] sm:$0xff] %vm1666, %v1659
        %1677 = vst.msk [vmem:[#allocation3 + $0x50] sm:$0xff] %vm1666, %v1660
        %1678 = vst.msk [vmem:[#allocation3 + $0x58] sm:$0xff] %vm1666, %v1661
        %1679 = vst.msk [vmem:[#allocation3 + $0x60] sm:$0xff] %vm1666, %v1662
        %1680 = vst.msk [vmem:[#allocation3 + $0x68] sm:$0xff] %vm1666, %v1663
        %1681 = vst.msk [vmem:[#allocation3 + $0x70] sm:$0xff] %vm1666, %v1664
        %1682 = vst.msk [vmem:[#allocation3 + $0x78] sm:$0xff] %vm1666, %v1665
        %v1683 = vld [vmem:[#allocation4] sm:$0xff]
        %v1684 = vld [vmem:[#allocation4 + $0x8] sm:$0xff]
        %v1685 = vld [vmem:[#allocation4 + $0x10] sm:$0xff]
        %v1686 = vld [vmem:[#allocation4 + $0x18] sm:$0xff]
        %v1687 = vld [vmem:[#allocation4 + $0x20] sm:$0xff]
        %v1688 = vld [vmem:[#allocation4 + $0x28] sm:$0xff]
        %v1689 = vld [vmem:[#allocation4 + $0x30] sm:$0xff]
        %v1690 = vld [vmem:[#allocation4 + $0x38] sm:$0xff]
        %v1691 = vld [vmem:[#allocation4 + $0x40] sm:$0xff]
        %v1692 = vld [vmem:[#allocation4 + $0x48] sm:$0xff]
        %v1693 = vld [vmem:[#allocation4 + $0x50] sm:$0xff]
        %v1694 = vld [vmem:[#allocation4 + $0x58] sm:$0xff]
        %v1695 = vld [vmem:[#allocation4 + $0x60] sm:$0xff]
        %v1696 = vld [vmem:[#allocation4 + $0x68] sm:$0xff]
        %v1697 = vld [vmem:[#allocation4 + $0x70] sm:$0xff]
        %v1698 = vld [vmem:[#allocation4 + $0x78] sm:$0xff]
        %v1699 = vmul.f32 %v1683, %v1427
        %v1700 = vmul.f32 %v1684, %v1429
        %v1701 = vmul.f32 %v1685, %v1431
        %v1702 = vmul.f32 %v1686, %v1433
        %v1703 = vmul.f32 %v1687, %v1435
        %v1704 = vmul.f32 %v1688, %v1437
        %v1705 = vmul.f32 %v1689, %v1439
        %v1706 = vmul.f32 %v1690, %v1441
        %v1707 = vmul.f32 %v1691, %v1443
        %v1708 = vmul.f32 %v1692, %v1445
        %v1709 = vmul.f32 %v1693, %v1447
        %v1710 = vmul.f32 %v1694, %v1449
        %v1711 = vmul.f32 %v1695, %v1451
        %v1712 = vmul.f32 %v1696, %v1453
        %v1713 = vmul.f32 %v1697, %v1455
        %v1714 = vmul.f32 %v1698, %v1457
        %v1715 = vmul.f32 %v1330, %v1555
        %v1716 = vmul.f32 %v1331, %v1557
        %v1717 = vmul.f32 %v1332, %v1559
        %v1718 = vmul.f32 %v1333, %v1561
        %v1719 = vmul.f32 %v1334, %v1563
        %v1720 = vmul.f32 %v1335, %v1565
        %v1721 = vmul.f32 %v1336, %v1567
        %v1722 = vmul.f32 %v1337, %v1569
        %v1723 = vmul.f32 %v1338, %v1571
        %v1724 = vmul.f32 %v1339, %v1573
        %v1725 = vmul.f32 %v1340, %v1575
        %v1726 = vmul.f32 %v1341, %v1577
        %v1727 = vmul.f32 %v1342, %v1579
        %v1728 = vmul.f32 %v1343, %v1581
        %v1729 = vmul.f32 %v1344, %v1583
        %v1730 = vmul.f32 %v1345, %v1585
        %1731 = vadd.xlane.f32.xlu0 %v1715
        %v1732 = vpop.xlane.xlu0 %1731
        %1733 = vadd.xlane.f32.xlu0 %v1716
        %v1734 = vpop.xlane.xlu0 %1733
        %1735 = vadd.xlane.f32.xlu0 %v1717
        %v1736 = vpop.xlane.xlu0 %1735
        %1737 = vadd.xlane.f32.xlu0 %v1718
        %v1738 = vpop.xlane.xlu0 %1737
        %1739 = vadd.xlane.f32.xlu0 %v1719
        %v1740 = vpop.xlane.xlu0 %1739
        %1741 = vadd.xlane.f32.xlu0 %v1720
        %v1742 = vpop.xlane.xlu0 %1741
        %1743 = vadd.xlane.f32.xlu0 %v1721
        %v1744 = vpop.xlane.xlu0 %1743
        %1745 = vadd.xlane.f32.xlu0 %v1722
        %v1746 = vpop.xlane.xlu0 %1745
        %1747 = vadd.xlane.f32.xlu0 %v1723
        %v1748 = vpop.xlane.xlu0 %1747
        %1749 = vadd.xlane.f32.xlu0 %v1724
        %v1750 = vpop.xlane.xlu0 %1749
        %1751 = vadd.xlane.f32.xlu0 %v1725
        %v1752 = vpop.xlane.xlu0 %1751
        %1753 = vadd.xlane.f32.xlu0 %v1726
        %v1754 = vpop.xlane.xlu0 %1753
        %1755 = vadd.xlane.f32.xlu0 %v1727
        %v1756 = vpop.xlane.xlu0 %1755
        %1757 = vadd.xlane.f32.xlu0 %v1728
        %v1758 = vpop.xlane.xlu0 %1757
        %1759 = vadd.xlane.f32.xlu0 %v1729
        %v1760 = vpop.xlane.xlu0 %1759
        %1761 = vadd.xlane.f32.xlu0 %v1730
        %v1762 = vpop.xlane.xlu0 %1761
        %v1763 = vadd.f32 %v1699, %v1732
        %v1764 = vadd.f32 %v1700, %v1734
        %v1765 = vadd.f32 %v1701, %v1736
        %v1766 = vadd.f32 %v1702, %v1738
        %v1767 = vadd.f32 %v1703, %v1740
        %v1768 = vadd.f32 %v1704, %v1742
        %v1769 = vadd.f32 %v1705, %v1744
        %v1770 = vadd.f32 %v1706, %v1746
        %v1771 = vadd.f32 %v1707, %v1748
        %v1772 = vadd.f32 %v1708, %v1750
        %v1773 = vadd.f32 %v1709, %v1752
        %v1774 = vadd.f32 %v1710, %v1754
        %v1775 = vadd.f32 %v1711, %v1756
        %v1776 = vadd.f32 %v1712, %v1758
        %v1777 = vadd.f32 %v1713, %v1760
        %v1778 = vadd.f32 %v1714, %v1762
        %1779 = vst.msk [vmem:[#allocation4] sm:$0xff] %vm1666, %v1763
        %1780 = vst.msk [vmem:[#allocation4 + $0x8] sm:$0xff] %vm1666, %v1764
        %1781 = vst.msk [vmem:[#allocation4 + $0x10] sm:$0xff] %vm1666, %v1765
        %1782 = vst.msk [vmem:[#allocation4 + $0x18] sm:$0xff] %vm1666, %v1766
        %1783 = vst.msk [vmem:[#allocation4 + $0x20] sm:$0xff] %vm1666, %v1767
        %1784 = vst.msk [vmem:[#allocation4 + $0x28] sm:$0xff] %vm1666, %v1768
        %1785 = vst.msk [vmem:[#allocation4 + $0x30] sm:$0xff] %vm1666, %v1769
        %1786 = vst.msk [vmem:[#allocation4 + $0x38] sm:$0xff] %vm1666, %v1770
        %1787 = vst.msk [vmem:[#allocation4 + $0x40] sm:$0xff] %vm1666, %v1771
        %1788 = vst.msk [vmem:[#allocation4 + $0x48] sm:$0xff] %vm1666, %v1772
        %1789 = vst.msk [vmem:[#allocation4 + $0x50] sm:$0xff] %vm1666, %v1773
        %1790 = vst.msk [vmem:[#allocation4 + $0x58] sm:$0xff] %vm1666, %v1774
        %1791 = vst.msk [vmem:[#allocation4 + $0x60] sm:$0xff] %vm1666, %v1775
        %1792 = vst.msk [vmem:[#allocation4 + $0x68] sm:$0xff] %vm1666, %v1776
        %1793 = vst.msk [vmem:[#allocation4 + $0x70] sm:$0xff] %vm1666, %v1777
        %1794 = vst.msk [vmem:[#allocation4 + $0x78] sm:$0xff] %vm1666, %v1778
        %1795 = vst.msk [vmem:[#allocation2] sm:$0xff] %vm1666, %v1394
        %1796 = vst.msk [vmem:[#allocation2 + $0x8] sm:$0xff] %vm1666, %v1395
        %1797 = vst.msk [vmem:[#allocation2 + $0x10] sm:$0xff] %vm1666, %v1396
        %1798 = vst.msk [vmem:[#allocation2 + $0x18] sm:$0xff] %vm1666, %v1397
        %1799 = vst.msk [vmem:[#allocation2 + $0x20] sm:$0xff] %vm1666, %v1398
        %1800 = vst.msk [vmem:[#allocation2 + $0x28] sm:$0xff] %vm1666, %v1399
        %1801 = vst.msk [vmem:[#allocation2 + $0x30] sm:$0xff] %vm1666, %v1400
        %1802 = vst.msk [vmem:[#allocation2 + $0x38] sm:$0xff] %vm1666, %v1401
        %1803 = vst.msk [vmem:[#allocation2 + $0x40] sm:$0xff] %vm1666, %v1402
        %1804 = vst.msk [vmem:[#allocation2 + $0x48] sm:$0xff] %vm1666, %v1403
        %1805 = vst.msk [vmem:[#allocation2 + $0x50] sm:$0xff] %vm1666, %v1404
        %1806 = vst.msk [vmem:[#allocation2 + $0x58] sm:$0xff] %vm1666, %v1405
        %1807 = vst.msk [vmem:[#allocation2 + $0x60] sm:$0xff] %vm1666, %v1406
        %1808 = vst.msk [vmem:[#allocation2 + $0x68] sm:$0xff] %vm1666, %v1407
        %1809 = vst.msk [vmem:[#allocation2 + $0x70] sm:$0xff] %vm1666, %v1408
        %1810 = vst.msk [vmem:[#allocation2 + $0x78] sm:$0xff] %vm1666, %v1409
        %v1811 = vsub.f32 0.0, %v200
        %v1812 = vsub.f32 0.0, %v201
        %v1813 = vsub.f32 0.0, %v202
        %v1814 = vsub.f32 0.0, %v203
        %v1815 = vsub.f32 0.0, %v204
        %v1816 = vsub.f32 0.0, %v205
        %v1817 = vsub.f32 0.0, %v206
        %v1818 = vsub.f32 0.0, %v207
        %v1819 = vsub.f32 0.0, %v208
        %v1820 = vsub.f32 0.0, %v209
        %v1821 = vsub.f32 0.0, %v210
        %v1822 = vsub.f32 0.0, %v211
        %v1823 = vsub.f32 0.0, %v212
        %v1824 = vsub.f32 0.0, %v213
        %v1825 = vsub.f32 0.0, %v214
        %v1826 = vsub.f32 0.0, %v215
        %v1827 = vld [vmem:[#allocation5] sm:$0xff]
        %v1828 = vld [vmem:[#allocation5 + $0x8] sm:$0xff]
        %v1829 = vld [vmem:[#allocation5 + $0x10] sm:$0xff]
        %v1830 = vld [vmem:[#allocation5 + $0x18] sm:$0xff]
        %v1831 = vld [vmem:[#allocation5 + $0x20] sm:$0xff]
        %v1832 = vld [vmem:[#allocation5 + $0x28] sm:$0xff]
        %v1833 = vld [vmem:[#allocation5 + $0x30] sm:$0xff]
        %v1834 = vld [vmem:[#allocation5 + $0x38] sm:$0xff]
        %v1835 = vld [vmem:[#allocation5 + $0x40] sm:$0xff]
        %v1836 = vld [vmem:[#allocation5 + $0x48] sm:$0xff]
        %v1837 = vld [vmem:[#allocation5 + $0x50] sm:$0xff]
        %v1838 = vld [vmem:[#allocation5 + $0x58] sm:$0xff]
        %v1839 = vld [vmem:[#allocation5 + $0x60] sm:$0xff]
        %v1840 = vld [vmem:[#allocation5 + $0x68] sm:$0xff]
        %v1841 = vld [vmem:[#allocation5 + $0x70] sm:$0xff]
        %v1842 = vld [vmem:[#allocation5 + $0x78] sm:$0xff]
        %vm1843 = vcmp.gt.f32.partialorder %v1330, 0.0
        %vm1844 = vcmp.gt.f32.partialorder %v1331, 0.0
        %vm1845 = vcmp.gt.f32.partialorder %v1332, 0.0
        %vm1846 = vcmp.gt.f32.partialorder %v1333, 0.0
        %vm1847 = vcmp.gt.f32.partialorder %v1334, 0.0
        %vm1848 = vcmp.gt.f32.partialorder %v1335, 0.0
        %vm1849 = vcmp.gt.f32.partialorder %v1336, 0.0
        %vm1850 = vcmp.gt.f32.partialorder %v1337, 0.0
        %vm1851 = vcmp.gt.f32.partialorder %v1338, 0.0
        %vm1852 = vcmp.gt.f32.partialorder %v1339, 0.0
        %vm1853 = vcmp.gt.f32.partialorder %v1340, 0.0
        %vm1854 = vcmp.gt.f32.partialorder %v1341, 0.0
        %vm1855 = vcmp.gt.f32.partialorder %v1342, 0.0
        %vm1856 = vcmp.gt.f32.partialorder %v1343, 0.0
        %vm1857 = vcmp.gt.f32.partialorder %v1344, 0.0
        %vm1858 = vcmp.gt.f32.partialorder %v1345, 0.0
        %v1859 = vsel %vm1843, %v1811, -1e+30
        %v1860 = vsel %vm1844, %v1812, -1e+30
        %v1861 = vsel %vm1845, %v1813, -1e+30
        %v1862 = vsel %vm1846, %v1814, -1e+30
        %v1863 = vsel %vm1847, %v1815, -1e+30
        %v1864 = vsel %vm1848, %v1816, -1e+30
        %v1865 = vsel %vm1849, %v1817, -1e+30
        %v1866 = vsel %vm1850, %v1818, -1e+30
        %v1867 = vsel %vm1851, %v1819, -1e+30
        %v1868 = vsel %vm1852, %v1820, -1e+30
        %v1869 = vsel %vm1853, %v1821, -1e+30
        %v1870 = vsel %vm1854, %v1822, -1e+30
        %v1871 = vsel %vm1855, %v1823, -1e+30
        %v1872 = vsel %vm1856, %v1824, -1e+30
        %v1873 = vsel %vm1857, %v1825, -1e+30
        %v1874 = vsel %vm1858, %v1826, -1e+30
        %1875 = vmax.xlane.f32.xlu0 %v1859
        %v1876 = vpop.xlane.xlu0 %1875
        %1877 = vmax.xlane.f32.xlu0 %v1860
        %v1878 = vpop.xlane.xlu0 %1877
        %1879 = vmax.xlane.f32.xlu0 %v1861
        %v1880 = vpop.xlane.xlu0 %1879
        %1881 = vmax.xlane.f32.xlu0 %v1862
        %v1882 = vpop.xlane.xlu0 %1881
        %1883 = vmax.xlane.f32.xlu0 %v1863
        %v1884 = vpop.xlane.xlu0 %1883
        %1885 = vmax.xlane.f32.xlu0 %v1864
        %v1886 = vpop.xlane.xlu0 %1885
        %1887 = vmax.xlane.f32.xlu0 %v1865
        %v1888 = vpop.xlane.xlu0 %1887
        %1889 = vmax.xlane.f32.xlu0 %v1866
        %v1890 = vpop.xlane.xlu0 %1889
        %1891 = vmax.xlane.f32.xlu0 %v1867
        %v1892 = vpop.xlane.xlu0 %1891
        %1893 = vmax.xlane.f32.xlu0 %v1868
        %v1894 = vpop.xlane.xlu0 %1893
        %1895 = vmax.xlane.f32.xlu0 %v1869
        %v1896 = vpop.xlane.xlu0 %1895
        %1897 = vmax.xlane.f32.xlu0 %v1870
        %v1898 = vpop.xlane.xlu0 %1897
        %1899 = vmax.xlane.f32.xlu0 %v1871
        %v1900 = vpop.xlane.xlu0 %1899
        %1901 = vmax.xlane.f32.xlu0 %v1872
        %v1902 = vpop.xlane.xlu0 %1901
        %1903 = vmax.xlane.f32.xlu0 %v1873
        %v1904 = vpop.xlane.xlu0 %1903
        %1905 = vmax.xlane.f32.xlu0 %v1874
        %v1906 = vpop.xlane.xlu0 %1905
        %v1907 = vmax.f32 %v1827, %v1876
        %v1908 = vmax.f32 %v1828, %v1878
        %v1909 = vmax.f32 %v1829, %v1880
        %v1910 = vmax.f32 %v1830, %v1882
        %v1911 = vmax.f32 %v1831, %v1884
        %v1912 = vmax.f32 %v1832, %v1886
        %v1913 = vmax.f32 %v1833, %v1888
        %v1914 = vmax.f32 %v1834, %v1890
        %v1915 = vmax.f32 %v1835, %v1892
        %v1916 = vmax.f32 %v1836, %v1894
        %v1917 = vmax.f32 %v1837, %v1896
        %v1918 = vmax.f32 %v1838, %v1898
        %v1919 = vmax.f32 %v1839, %v1900
        %v1920 = vmax.f32 %v1840, %v1902
        %v1921 = vmax.f32 %v1841, %v1904
        %v1922 = vmax.f32 %v1842, %v1906
        %v1923 = vsub.f32 %v1827, %v1907
        %v1924 = vsub.f32 %v1828, %v1908
        %v1925 = vsub.f32 %v1829, %v1909
        %v1926 = vsub.f32 %v1830, %v1910
        %v1927 = vsub.f32 %v1831, %v1911
        %v1928 = vsub.f32 %v1832, %v1912
        %v1929 = vsub.f32 %v1833, %v1913
        %v1930 = vsub.f32 %v1834, %v1914
        %v1931 = vsub.f32 %v1835, %v1915
        %v1932 = vsub.f32 %v1836, %v1916
        %v1933 = vsub.f32 %v1837, %v1917
        %v1934 = vsub.f32 %v1838, %v1918
        %v1935 = vsub.f32 %v1839, %v1919
        %v1936 = vsub.f32 %v1840, %v1920
        %v1937 = vsub.f32 %v1841, %v1921
        %v1938 = vsub.f32 %v1842, %v1922
        %v1939 = vmul.f32 %v1923, 1.442695
        %v1940 = vpow.pop %v1939
        %v1941 = vmul.f32 %v1924, 1.442695
        %v1942 = vpow.pop %v1941
        %v1943 = vmul.f32 %v1925, 1.442695
        %v1944 = vpow.pop %v1943
        %v1945 = vmul.f32 %v1926, 1.442695
        %v1946 = vpow.pop %v1945
        %v1947 = vmul.f32 %v1927, 1.442695
        %v1948 = vpow.pop %v1947
        %v1949 = vmul.f32 %v1928, 1.442695
        %v1950 = vpow.pop %v1949
        %v1951 = vmul.f32 %v1929, 1.442695
        %v1952 = vpow.pop %v1951
        %v1953 = vmul.f32 %v1930, 1.442695
        %v1954 = vpow.pop %v1953
        %v1955 = vmul.f32 %v1931, 1.442695
        %v1956 = vpow.pop %v1955
        %v1957 = vmul.f32 %v1932, 1.442695
        %v1958 = vpow.pop %v1957
        %v1959 = vmul.f32 %v1933, 1.442695
        %v1960 = vpow.pop %v1959
        %v1961 = vmul.f32 %v1934, 1.442695
        %v1962 = vpow.pop %v1961
        %v1963 = vmul.f32 %v1935, 1.442695
        %v1964 = vpow.pop %v1963
        %v1965 = vmul.f32 %v1936, 1.442695
        %v1966 = vpow.pop %v1965
        %v1967 = vmul.f32 %v1937, 1.442695
        %v1968 = vpow.pop %v1967
        %v1969 = vmul.f32 %v1938, 1.442695
        %v1970 = vpow.pop %v1969
        %1972 = vset.pattern.permute.xlu0 0
        %1973 = vperm.xlu0 %1972, %v1907
        %v1974 = vpop.permute.xlu0 %1973
        %1977 = vset.pattern.permute.xlu0 0
        %1978 = vperm.xlu0 %1977, %v1908
        %v1979 = vpop.permute.xlu0 %1978
        %1982 = vset.pattern.permute.xlu0 0
        %1983 = vperm.xlu0 %1982, %v1909
        %v1984 = vpop.permute.xlu0 %1983
        %1987 = vset.pattern.permute.xlu0 0
        %1988 = vperm.xlu0 %1987, %v1910
        %v1989 = vpop.permute.xlu0 %1988
        %1992 = vset.pattern.permute.xlu0 0
        %1993 = vperm.xlu0 %1992, %v1911
        %v1994 = vpop.permute.xlu0 %1993
        %1997 = vset.pattern.permute.xlu0 0
        %1998 = vperm.xlu0 %1997, %v1912
        %v1999 = vpop.permute.xlu0 %1998
        %2002 = vset.pattern.permute.xlu0 0
        %2003 = vperm.xlu0 %2002, %v1913
        %v2004 = vpop.permute.xlu0 %2003
        %2007 = vset.pattern.permute.xlu0 0
        %2008 = vperm.xlu0 %2007, %v1914
        %v2009 = vpop.permute.xlu0 %2008
        %2012 = vset.pattern.permute.xlu0 0
        %2013 = vperm.xlu0 %2012, %v1915
        %v2014 = vpop.permute.xlu0 %2013
        %2017 = vset.pattern.permute.xlu0 0
        %2018 = vperm.xlu0 %2017, %v1916
        %v2019 = vpop.permute.xlu0 %2018
        %2022 = vset.pattern.permute.xlu0 0
        %2023 = vperm.xlu0 %2022, %v1917
        %v2024 = vpop.permute.xlu0 %2023
        %2027 = vset.pattern.permute.xlu0 0
        %2028 = vperm.xlu0 %2027, %v1918
        %v2029 = vpop.permute.xlu0 %2028
        %2032 = vset.pattern.permute.xlu0 0
        %2033 = vperm.xlu0 %2032, %v1919
        %v2034 = vpop.permute.xlu0 %2033
        %2037 = vset.pattern.permute.xlu0 0
        %2038 = vperm.xlu0 %2037, %v1920
        %v2039 = vpop.permute.xlu0 %2038
        %2042 = vset.pattern.permute.xlu0 0
        %2043 = vperm.xlu0 %2042, %v1921
        %v2044 = vpop.permute.xlu0 %2043
        %2047 = vset.pattern.permute.xlu0 0
        %2048 = vperm.xlu0 %2047, %v1922
        %v2049 = vpop.permute.xlu0 %2048
        %v2051 = vsub.f32 %v1811, %v1974
        %v2052 = vsub.f32 %v1812, %v1979
        %v2053 = vsub.f32 %v1813, %v1984
        %v2054 = vsub.f32 %v1814, %v1989
        %v2055 = vsub.f32 %v1815, %v1994
        %v2056 = vsub.f32 %v1816, %v1999
        %v2057 = vsub.f32 %v1817, %v2004
        %v2058 = vsub.f32 %v1818, %v2009
        %v2059 = vsub.f32 %v1819, %v2014
        %v2060 = vsub.f32 %v1820, %v2019
        %v2061 = vsub.f32 %v1821, %v2024
        %v2062 = vsub.f32 %v1822, %v2029
        %v2063 = vsub.f32 %v1823, %v2034
        %v2064 = vsub.f32 %v1824, %v2039
        %v2065 = vsub.f32 %v1825, %v2044
        %v2066 = vsub.f32 %v1826, %v2049
        %v2067 = vmin.f32 %v2051, 0.0
        %v2068 = vmin.f32 %v2052, 0.0
        %v2069 = vmin.f32 %v2053, 0.0
        %v2070 = vmin.f32 %v2054, 0.0
        %v2071 = vmin.f32 %v2055, 0.0
        %v2072 = vmin.f32 %v2056, 0.0
        %v2073 = vmin.f32 %v2057, 0.0
        %v2074 = vmin.f32 %v2058, 0.0
        %v2075 = vmin.f32 %v2059, 0.0
        %v2076 = vmin.f32 %v2060, 0.0
        %v2077 = vmin.f32 %v2061, 0.0
        %v2078 = vmin.f32 %v2062, 0.0
        %v2079 = vmin.f32 %v2063, 0.0
        %v2080 = vmin.f32 %v2064, 0.0
        %v2081 = vmin.f32 %v2065, 0.0
        %v2082 = vmin.f32 %v2066, 0.0
        %v2083 = vmul.f32 %v2067, 1.442695
        %v2084 = vpow.pop %v2083
        %v2085 = vmul.f32 %v2068, 1.442695
        %v2086 = vpow.pop %v2085
        %v2087 = vmul.f32 %v2069, 1.442695
        %v2088 = vpow.pop %v2087
        %v2089 = vmul.f32 %v2070, 1.442695
        %v2090 = vpow.pop %v2089
        %v2091 = vmul.f32 %v2071, 1.442695
        %v2092 = vpow.pop %v2091
        %v2093 = vmul.f32 %v2072, 1.442695
        %v2094 = vpow.pop %v2093
        %v2095 = vmul.f32 %v2073, 1.442695
        %v2096 = vpow.pop %v2095
        %v2097 = vmul.f32 %v2074, 1.442695
        %v2098 = vpow.pop %v2097
        %v2099 = vmul.f32 %v2075, 1.442695
        %v2100 = vpow.pop %v2099
        %v2101 = vmul.f32 %v2076, 1.442695
        %v2102 = vpow.pop %v2101
        %v2103 = vmul.f32 %v2077, 1.442695
        %v2104 = vpow.pop %v2103
        %v2105 = vmul.f32 %v2078, 1.442695
        %v2106 = vpow.pop %v2105
        %v2107 = vmul.f32 %v2079, 1.442695
        %v2108 = vpow.pop %v2107
        %v2109 = vmul.f32 %v2080, 1.442695
        %v2110 = vpow.pop %v2109
        %v2111 = vmul.f32 %v2081, 1.442695
        %v2112 = vpow.pop %v2111
        %v2113 = vmul.f32 %v2082, 1.442695
        %v2114 = vpow.pop %v2113
        %v2115 = vld [vmem:[#allocation6] sm:$0xff]
        %v2116 = vld [vmem:[#allocation6 + $0x8] sm:$0xff]
        %v2117 = vld [vmem:[#allocation6 + $0x10] sm:$0xff]
        %v2118 = vld [vmem:[#allocation6 + $0x18] sm:$0xff]
        %v2119 = vld [vmem:[#allocation6 + $0x20] sm:$0xff]
        %v2120 = vld [vmem:[#allocation6 + $0x28] sm:$0xff]
        %v2121 = vld [vmem:[#allocation6 + $0x30] sm:$0xff]
        %v2122 = vld [vmem:[#allocation6 + $0x38] sm:$0xff]
        %v2123 = vld [vmem:[#allocation6 + $0x40] sm:$0xff]
        %v2124 = vld [vmem:[#allocation6 + $0x48] sm:$0xff]
        %v2125 = vld [vmem:[#allocation6 + $0x50] sm:$0xff]
        %v2126 = vld [vmem:[#allocation6 + $0x58] sm:$0xff]
        %v2127 = vld [vmem:[#allocation6 + $0x60] sm:$0xff]
        %v2128 = vld [vmem:[#allocation6 + $0x68] sm:$0xff]
        %v2129 = vld [vmem:[#allocation6 + $0x70] sm:$0xff]
        %v2130 = vld [vmem:[#allocation6 + $0x78] sm:$0xff]
        %v2131 = vmul.f32 %v2115, %v1940
        %v2132 = vmul.f32 %v2116, %v1942
        %v2133 = vmul.f32 %v2117, %v1944
        %v2134 = vmul.f32 %v2118, %v1946
        %v2135 = vmul.f32 %v2119, %v1948
        %v2136 = vmul.f32 %v2120, %v1950
        %v2137 = vmul.f32 %v2121, %v1952
        %v2138 = vmul.f32 %v2122, %v1954
        %v2139 = vmul.f32 %v2123, %v1956
        %v2140 = vmul.f32 %v2124, %v1958
        %v2141 = vmul.f32 %v2125, %v1960
        %v2142 = vmul.f32 %v2126, %v1962
        %v2143 = vmul.f32 %v2127, %v1964
        %v2144 = vmul.f32 %v2128, %v1966
        %v2145 = vmul.f32 %v2129, %v1968
        %v2146 = vmul.f32 %v2130, %v1970
        %v2147 = vmul.f32 %v1330, %v2084
        %v2148 = vmul.f32 %v1331, %v2086
        %v2149 = vmul.f32 %v1332, %v2088
        %v2150 = vmul.f32 %v1333, %v2090
        %v2151 = vmul.f32 %v1334, %v2092
        %v2152 = vmul.f32 %v1335, %v2094
        %v2153 = vmul.f32 %v1336, %v2096
        %v2154 = vmul.f32 %v1337, %v2098
        %v2155 = vmul.f32 %v1338, %v2100
        %v2156 = vmul.f32 %v1339, %v2102
        %v2157 = vmul.f32 %v1340, %v2104
        %v2158 = vmul.f32 %v1341, %v2106
        %v2159 = vmul.f32 %v1342, %v2108
        %v2160 = vmul.f32 %v1343, %v2110
        %v2161 = vmul.f32 %v1344, %v2112
        %v2162 = vmul.f32 %v1345, %v2114
        %2163 = vadd.xlane.f32.xlu0 %v2147
        %v2164 = vpop.xlane.xlu0 %2163
        %2165 = vadd.xlane.f32.xlu0 %v2148
        %v2166 = vpop.xlane.xlu0 %2165
        %2167 = vadd.xlane.f32.xlu0 %v2149
        %v2168 = vpop.xlane.xlu0 %2167
        %2169 = vadd.xlane.f32.xlu0 %v2150
        %v2170 = vpop.xlane.xlu0 %2169
        %2171 = vadd.xlane.f32.xlu0 %v2151
        %v2172 = vpop.xlane.xlu0 %2171
        %2173 = vadd.xlane.f32.xlu0 %v2152
        %v2174 = vpop.xlane.xlu0 %2173
        %2175 = vadd.xlane.f32.xlu0 %v2153
        %v2176 = vpop.xlane.xlu0 %2175
        %2177 = vadd.xlane.f32.xlu0 %v2154
        %v2178 = vpop.xlane.xlu0 %2177
        %2179 = vadd.xlane.f32.xlu0 %v2155
        %v2180 = vpop.xlane.xlu0 %2179
        %2181 = vadd.xlane.f32.xlu0 %v2156
        %v2182 = vpop.xlane.xlu0 %2181
        %2183 = vadd.xlane.f32.xlu0 %v2157
        %v2184 = vpop.xlane.xlu0 %2183
        %2185 = vadd.xlane.f32.xlu0 %v2158
        %v2186 = vpop.xlane.xlu0 %2185
        %2187 = vadd.xlane.f32.xlu0 %v2159
        %v2188 = vpop.xlane.xlu0 %2187
        %2189 = vadd.xlane.f32.xlu0 %v2160
        %v2190 = vpop.xlane.xlu0 %2189
        %2191 = vadd.xlane.f32.xlu0 %v2161
        %v2192 = vpop.xlane.xlu0 %2191
        %2193 = vadd.xlane.f32.xlu0 %v2162
        %v2194 = vpop.xlane.xlu0 %2193
        %v2195 = vadd.f32 %v2131, %v2164
        %v2196 = vadd.f32 %v2132, %v2166
        %v2197 = vadd.f32 %v2133, %v2168
        %v2198 = vadd.f32 %v2134, %v2170
        %v2199 = vadd.f32 %v2135, %v2172
        %v2200 = vadd.f32 %v2136, %v2174
        %v2201 = vadd.f32 %v2137, %v2176
        %v2202 = vadd.f32 %v2138, %v2178
        %v2203 = vadd.f32 %v2139, %v2180
        %v2204 = vadd.f32 %v2140, %v2182
        %v2205 = vadd.f32 %v2141, %v2184
        %v2206 = vadd.f32 %v2142, %v2186
        %v2207 = vadd.f32 %v2143, %v2188
        %v2208 = vadd.f32 %v2144, %v2190
        %v2209 = vadd.f32 %v2145, %v2192
        %v2210 = vadd.f32 %v2146, %v2194
        %2211 = vst.msk [vmem:[#allocation6] sm:$0xff] %vm1666, %v2195
        %2212 = vst.msk [vmem:[#allocation6 + $0x8] sm:$0xff] %vm1666, %v2196
        %2213 = vst.msk [vmem:[#allocation6 + $0x10] sm:$0xff] %vm1666, %v2197
        %2214 = vst.msk [vmem:[#allocation6 + $0x18] sm:$0xff] %vm1666, %v2198
        %2215 = vst.msk [vmem:[#allocation6 + $0x20] sm:$0xff] %vm1666, %v2199
        %2216 = vst.msk [vmem:[#allocation6 + $0x28] sm:$0xff] %vm1666, %v2200
        %2217 = vst.msk [vmem:[#allocation6 + $0x30] sm:$0xff] %vm1666, %v2201
        %2218 = vst.msk [vmem:[#allocation6 + $0x38] sm:$0xff] %vm1666, %v2202
        %2219 = vst.msk [vmem:[#allocation6 + $0x40] sm:$0xff] %vm1666, %v2203
        %2220 = vst.msk [vmem:[#allocation6 + $0x48] sm:$0xff] %vm1666, %v2204
        %2221 = vst.msk [vmem:[#allocation6 + $0x50] sm:$0xff] %vm1666, %v2205
        %2222 = vst.msk [vmem:[#allocation6 + $0x58] sm:$0xff] %vm1666, %v2206
        %2223 = vst.msk [vmem:[#allocation6 + $0x60] sm:$0xff] %vm1666, %v2207
        %2224 = vst.msk [vmem:[#allocation6 + $0x68] sm:$0xff] %vm1666, %v2208
        %2225 = vst.msk [vmem:[#allocation6 + $0x70] sm:$0xff] %vm1666, %v2209
        %2226 = vst.msk [vmem:[#allocation6 + $0x78] sm:$0xff] %vm1666, %v2210
        %2227 = vst.msk [vmem:[#allocation5] sm:$0xff] %vm1666, %v1907
        %2228 = vst.msk [vmem:[#allocation5 + $0x8] sm:$0xff] %vm1666, %v1908
        %2229 = vst.msk [vmem:[#allocation5 + $0x10] sm:$0xff] %vm1666, %v1909
        %2230 = vst.msk [vmem:[#allocation5 + $0x18] sm:$0xff] %vm1666, %v1910
        %2231 = vst.msk [vmem:[#allocation5 + $0x20] sm:$0xff] %vm1666, %v1911
        %2232 = vst.msk [vmem:[#allocation5 + $0x28] sm:$0xff] %vm1666, %v1912
        %2233 = vst.msk [vmem:[#allocation5 + $0x30] sm:$0xff] %vm1666, %v1913
        %2234 = vst.msk [vmem:[#allocation5 + $0x38] sm:$0xff] %vm1666, %v1914
        %2235 = vst.msk [vmem:[#allocation5 + $0x40] sm:$0xff] %vm1666, %v1915
        %2236 = vst.msk [vmem:[#allocation5 + $0x48] sm:$0xff] %vm1666, %v1916
        %2237 = vst.msk [vmem:[#allocation5 + $0x50] sm:$0xff] %vm1666, %v1917
        %2238 = vst.msk [vmem:[#allocation5 + $0x58] sm:$0xff] %vm1666, %v1918
        %2239 = vst.msk [vmem:[#allocation5 + $0x60] sm:$0xff] %vm1666, %v1919
        %2240 = vst.msk [vmem:[#allocation5 + $0x68] sm:$0xff] %vm1666, %v1920
        %2241 = vst.msk [vmem:[#allocation5 + $0x70] sm:$0xff] %vm1666, %v1921
        %2242 = vst.msk [vmem:[#allocation5 + $0x78] sm:$0xff] %vm1666, %v1922
        %p2243 = scmp.eq.s32.totalorder %s24, 1
        // Predicated region
        $region37: #{tpu_custom_call.1} parent=27 // pred_check
          %p2244 = pneg %p2243
        $region38: #{tpu_custom_call.1} parent=27 // pred_check_branch
          %2246 = sbr.rel (%p2244) target = $region40
        $region39: #{tpu_custom_call.1} parent=27 // pred_region
          %v2247 = vld [vmem:[#allocation2] sm:$0xff]
          %v2248 = vld [vmem:[#allocation2 + $0x8] sm:$0xff]
          %v2249 = vld [vmem:[#allocation2 + $0x10] sm:$0xff]
          %v2250 = vld [vmem:[#allocation2 + $0x18] sm:$0xff]
          %v2251 = vld [vmem:[#allocation2 + $0x20] sm:$0xff]
          %v2252 = vld [vmem:[#allocation2 + $0x28] sm:$0xff]
          %v2253 = vld [vmem:[#allocation2 + $0x30] sm:$0xff]
          %v2254 = vld [vmem:[#allocation2 + $0x38] sm:$0xff]
          %v2255 = vld [vmem:[#allocation2 + $0x40] sm:$0xff]
          %v2256 = vld [vmem:[#allocation2 + $0x48] sm:$0xff]
          %v2257 = vld [vmem:[#allocation2 + $0x50] sm:$0xff]
          %v2258 = vld [vmem:[#allocation2 + $0x58] sm:$0xff]
          %v2259 = vld [vmem:[#allocation2 + $0x60] sm:$0xff]
          %v2260 = vld [vmem:[#allocation2 + $0x68] sm:$0xff]
          %v2261 = vld [vmem:[#allocation2 + $0x70] sm:$0xff]
          %v2262 = vld [vmem:[#allocation2 + $0x78] sm:$0xff]
          %v2263 = vld [vmem:[#allocation3] sm:$0xff]
          %v2264 = vld [vmem:[#allocation3 + $0x8] sm:$0xff]
          %v2265 = vld [vmem:[#allocation3 + $0x10] sm:$0xff]
          %v2266 = vld [vmem:[#allocation3 + $0x18] sm:$0xff]
          %v2267 = vld [vmem:[#allocation3 + $0x20] sm:$0xff]
          %v2268 = vld [vmem:[#allocation3 + $0x28] sm:$0xff]
          %v2269 = vld [vmem:[#allocation3 + $0x30] sm:$0xff]
          %v2270 = vld [vmem:[#allocation3 + $0x38] sm:$0xff]
          %v2271 = vld [vmem:[#allocation3 + $0x40] sm:$0xff]
          %v2272 = vld [vmem:[#allocation3 + $0x48] sm:$0xff]
          %v2273 = vld [vmem:[#allocation3 + $0x50] sm:$0xff]
          %v2274 = vld [vmem:[#allocation3 + $0x58] sm:$0xff]
          %v2275 = vld [vmem:[#allocation3 + $0x60] sm:$0xff]
          %v2276 = vld [vmem:[#allocation3 + $0x68] sm:$0xff]
          %v2277 = vld [vmem:[#allocation3 + $0x70] sm:$0xff]
          %v2278 = vld [vmem:[#allocation3 + $0x78] sm:$0xff]
          %v2279 = vlog2.pop %v2263
          %v2280 = vmul.f32 %v2279, 0.6931472
          %v2281 = vlog2.pop %v2264
          %v2282 = vmul.f32 %v2281, 0.6931472
          %v2283 = vlog2.pop %v2265
          %v2284 = vmul.f32 %v2283, 0.6931472
          %v2285 = vlog2.pop %v2266
          %v2286 = vmul.f32 %v2285, 0.6931472
          %v2287 = vlog2.pop %v2267
          %v2288 = vmul.f32 %v2287, 0.6931472
          %v2289 = vlog2.pop %v2268
          %v2290 = vmul.f32 %v2289, 0.6931472
          %v2291 = vlog2.pop %v2269
          %v2292 = vmul.f32 %v2291, 0.6931472
          %v2293 = vlog2.pop %v2270
          %v2294 = vmul.f32 %v2293, 0.6931472
          %v2295 = vlog2.pop %v2271
          %v2296 = vmul.f32 %v2295, 0.6931472
          %v2297 = vlog2.pop %v2272
          %v2298 = vmul.f32 %v2297, 0.6931472
          %v2299 = vlog2.pop %v2273
          %v2300 = vmul.f32 %v2299, 0.6931472
          %v2301 = vlog2.pop %v2274
          %v2302 = vmul.f32 %v2301, 0.6931472
          %v2303 = vlog2.pop %v2275
          %v2304 = vmul.f32 %v2303, 0.6931472
          %v2305 = vlog2.pop %v2276
          %v2306 = vmul.f32 %v2305, 0.6931472
          %v2307 = vlog2.pop %v2277
          %v2308 = vmul.f32 %v2307, 0.6931472
          %v2309 = vlog2.pop %v2278
          %v2310 = vmul.f32 %v2309, 0.6931472
          %v2311 = vadd.f32 %v2247, %v2280
          %v2312 = vadd.f32 %v2248, %v2282
          %v2313 = vadd.f32 %v2249, %v2284
          %v2314 = vadd.f32 %v2250, %v2286
          %v2315 = vadd.f32 %v2251, %v2288
          %v2316 = vadd.f32 %v2252, %v2290
          %v2317 = vadd.f32 %v2253, %v2292
          %v2318 = vadd.f32 %v2254, %v2294
          %v2319 = vadd.f32 %v2255, %v2296
          %v2320 = vadd.f32 %v2256, %v2298
          %v2321 = vadd.f32 %v2257, %v2300
          %v2322 = vadd.f32 %v2258, %v2302
          %v2323 = vadd.f32 %v2259, %v2304
          %v2324 = vadd.f32 %v2260, %v2306
          %v2325 = vadd.f32 %v2261, %v2308
          %v2326 = vadd.f32 %v2262, %v2310
          %v2327 = vld [vmem:[#allocation5] sm:$0xff]
          %v2328 = vld [vmem:[#allocation5 + $0x8] sm:$0xff]
          %v2329 = vld [vmem:[#allocation5 + $0x10] sm:$0xff]
          %v2330 = vld [vmem:[#allocation5 + $0x18] sm:$0xff]
          %v2331 = vld [vmem:[#allocation5 + $0x20] sm:$0xff]
          %v2332 = vld [vmem:[#allocation5 + $0x28] sm:$0xff]
          %v2333 = vld [vmem:[#allocation5 + $0x30] sm:$0xff]
          %v2334 = vld [vmem:[#allocation5 + $0x38] sm:$0xff]
          %v2335 = vld [vmem:[#allocation5 + $0x40] sm:$0xff]
          %v2336 = vld [vmem:[#allocation5 + $0x48] sm:$0xff]
          %v2337 = vld [vmem:[#allocation5 + $0x50] sm:$0xff]
          %v2338 = vld [vmem:[#allocation5 + $0x58] sm:$0xff]
          %v2339 = vld [vmem:[#allocation5 + $0x60] sm:$0xff]
          %v2340 = vld [vmem:[#allocation5 + $0x68] sm:$0xff]
          %v2341 = vld [vmem:[#allocation5 + $0x70] sm:$0xff]
          %v2342 = vld [vmem:[#allocation5 + $0x78] sm:$0xff]
          %v2343 = vld [vmem:[#allocation6] sm:$0xff]
          %v2344 = vld [vmem:[#allocation6 + $0x8] sm:$0xff]
          %v2345 = vld [vmem:[#allocation6 + $0x10] sm:$0xff]
          %v2346 = vld [vmem:[#allocation6 + $0x18] sm:$0xff]
          %v2347 = vld [vmem:[#allocation6 + $0x20] sm:$0xff]
          %v2348 = vld [vmem:[#allocation6 + $0x28] sm:$0xff]
          %v2349 = vld [vmem:[#allocation6 + $0x30] sm:$0xff]
          %v2350 = vld [vmem:[#allocation6 + $0x38] sm:$0xff]
          %v2351 = vld [vmem:[#allocation6 + $0x40] sm:$0xff]
          %v2352 = vld [vmem:[#allocation6 + $0x48] sm:$0xff]
          %v2353 = vld [vmem:[#allocation6 + $0x50] sm:$0xff]
          %v2354 = vld [vmem:[#allocation6 + $0x58] sm:$0xff]
          %v2355 = vld [vmem:[#allocation6 + $0x60] sm:$0xff]
          %v2356 = vld [vmem:[#allocation6 + $0x68] sm:$0xff]
          %v2357 = vld [vmem:[#allocation6 + $0x70] sm:$0xff]
          %v2358 = vld [vmem:[#allocation6 + $0x78] sm:$0xff]
          %v2359 = vlog2.pop %v2343
          %v2360 = vmul.f32 %v2359, 0.6931472
          %v2361 = vlog2.pop %v2344
          %v2362 = vmul.f32 %v2361, 0.6931472
          %v2363 = vlog2.pop %v2345
          %v2364 = vmul.f32 %v2363, 0.6931472
          %v2365 = vlog2.pop %v2346
          %v2366 = vmul.f32 %v2365, 0.6931472
          %v2367 = vlog2.pop %v2347
          %v2368 = vmul.f32 %v2367, 0.6931472
          %v2369 = vlog2.pop %v2348
          %v2370 = vmul.f32 %v2369, 0.6931472
          %v2371 = vlog2.pop %v2349
          %v2372 = vmul.f32 %v2371, 0.6931472
          %v2373 = vlog2.pop %v2350
          %v2374 = vmul.f32 %v2373, 0.6931472
          %v2375 = vlog2.pop %v2351
          %v2376 = vmul.f32 %v2375, 0.6931472
          %v2377 = vlog2.pop %v2352
          %v2378 = vmul.f32 %v2377, 0.6931472
          %v2379 = vlog2.pop %v2353
          %v2380 = vmul.f32 %v2379, 0.6931472
          %v2381 = vlog2.pop %v2354
          %v2382 = vmul.f32 %v2381, 0.6931472
          %v2383 = vlog2.pop %v2355
          %v2384 = vmul.f32 %v2383, 0.6931472
          %v2385 = vlog2.pop %v2356
          %v2386 = vmul.f32 %v2385, 0.6931472
          %v2387 = vlog2.pop %v2357
          %v2388 = vmul.f32 %v2387, 0.6931472
          %v2389 = vlog2.pop %v2358
          %v2390 = vmul.f32 %v2389, 0.6931472
          %v2391 = vadd.f32 %v2327, %v2360
          %v2392 = vadd.f32 %v2328, %v2362
          %v2393 = vadd.f32 %v2329, %v2364
          %v2394 = vadd.f32 %v2330, %v2366
          %v2395 = vadd.f32 %v2331, %v2368
          %v2396 = vadd.f32 %v2332, %v2370
          %v2397 = vadd.f32 %v2333, %v2372
          %v2398 = vadd.f32 %v2334, %v2374
          %v2399 = vadd.f32 %v2335, %v2376
          %v2400 = vadd.f32 %v2336, %v2378
          %v2401 = vadd.f32 %v2337, %v2380
          %v2402 = vadd.f32 %v2338, %v2382
          %v2403 = vadd.f32 %v2339, %v2384
          %v2404 = vadd.f32 %v2340, %v2386
          %v2405 = vadd.f32 %v2341, %v2388
          %v2406 = vadd.f32 %v2342, %v2390
          %v2407 = vld [vmem:[#allocation4] sm:$0xff]
          %v2408 = vld [vmem:[#allocation4 + $0x8] sm:$0xff]
          %v2409 = vld [vmem:[#allocation4 + $0x10] sm:$0xff]
          %v2410 = vld [vmem:[#allocation4 + $0x18] sm:$0xff]
          %v2411 = vld [vmem:[#allocation4 + $0x20] sm:$0xff]
          %v2412 = vld [vmem:[#allocation4 + $0x28] sm:$0xff]
          %v2413 = vld [vmem:[#allocation4 + $0x30] sm:$0xff]
          %v2414 = vld [vmem:[#allocation4 + $0x38] sm:$0xff]
          %v2415 = vld [vmem:[#allocation4 + $0x40] sm:$0xff]
          %v2416 = vld [vmem:[#allocation4 + $0x48] sm:$0xff]
          %v2417 = vld [vmem:[#allocation4 + $0x50] sm:$0xff]
          %v2418 = vld [vmem:[#allocation4 + $0x58] sm:$0xff]
          %v2419 = vld [vmem:[#allocation4 + $0x60] sm:$0xff]
          %v2420 = vld [vmem:[#allocation4 + $0x68] sm:$0xff]
          %v2421 = vld [vmem:[#allocation4 + $0x70] sm:$0xff]
          %v2422 = vld [vmem:[#allocation4 + $0x78] sm:$0xff]
          %v2423 = vrcp.pop %v2263
          %v2424 = vmul.f32 %v2407, %v2423
          %v2425 = vrcp.pop %v2264
          %v2426 = vmul.f32 %v2408, %v2425
          %v2427 = vrcp.pop %v2265
          %v2428 = vmul.f32 %v2409, %v2427
          %v2429 = vrcp.pop %v2266
          %v2430 = vmul.f32 %v2410, %v2429
          %v2431 = vrcp.pop %v2267
          %v2432 = vmul.f32 %v2411, %v2431
          %v2433 = vrcp.pop %v2268
          %v2434 = vmul.f32 %v2412, %v2433
          %v2435 = vrcp.pop %v2269
          %v2436 = vmul.f32 %v2413, %v2435
          %v2437 = vrcp.pop %v2270
          %v2438 = vmul.f32 %v2414, %v2437
          %v2439 = vrcp.pop %v2271
          %v2440 = vmul.f32 %v2415, %v2439
          %v2441 = vrcp.pop %v2272
          %v2442 = vmul.f32 %v2416, %v2441
          %v2443 = vrcp.pop %v2273
          %v2444 = vmul.f32 %v2417, %v2443
          %v2445 = vrcp.pop %v2274
          %v2446 = vmul.f32 %v2418, %v2445
          %v2447 = vrcp.pop %v2275
          %v2448 = vmul.f32 %v2419, %v2447
          %v2449 = vrcp.pop %v2276
          %v2450 = vmul.f32 %v2420, %v2449
          %v2451 = vrcp.pop %v2277
          %v2452 = vmul.f32 %v2421, %v2451
          %v2453 = vrcp.pop %v2278
          %v2454 = vmul.f32 %v2422, %v2453
          %v2455 = vsub.f32 1.0, %v2424
          %v2456 = vsub.f32 1.0, %v2426
          %v2457 = vsub.f32 1.0, %v2428
          %v2458 = vsub.f32 1.0, %v2430
          %v2459 = vsub.f32 1.0, %v2432
          %v2460 = vsub.f32 1.0, %v2434
          %v2461 = vsub.f32 1.0, %v2436
          %v2462 = vsub.f32 1.0, %v2438
          %v2463 = vsub.f32 1.0, %v2440
          %v2464 = vsub.f32 1.0, %v2442
          %v2465 = vsub.f32 1.0, %v2444
          %v2466 = vsub.f32 1.0, %v2446
          %v2467 = vsub.f32 1.0, %v2448
          %v2468 = vsub.f32 1.0, %v2450
          %v2469 = vsub.f32 1.0, %v2452
          %v2470 = vsub.f32 1.0, %v2454
          %v2471 = vmax.f32 %v2455, 1e-07
          %v2472 = vmax.f32 %v2456, 1e-07
          %v2473 = vmax.f32 %v2457, 1e-07
          %v2474 = vmax.f32 %v2458, 1e-07
          %v2475 = vmax.f32 %v2459, 1e-07
          %v2476 = vmax.f32 %v2460, 1e-07
          %v2477 = vmax.f32 %v2461, 1e-07
          %v2478 = vmax.f32 %v2462, 1e-07
          %v2479 = vmax.f32 %v2463, 1e-07
          %v2480 = vmax.f32 %v2464, 1e-07
          %v2481 = vmax.f32 %v2465, 1e-07
          %v2482 = vmax.f32 %v2466, 1e-07
          %v2483 = vmax.f32 %v2467, 1e-07
          %v2484 = vmax.f32 %v2468, 1e-07
          %v2485 = vmax.f32 %v2469, 1e-07
          %v2486 = vmax.f32 %v2470, 1e-07
          %v2487 = vmin.f32 %v2471, 1.0
          %v2488 = vmin.f32 %v2472, 1.0
          %v2489 = vmin.f32 %v2473, 1.0
          %v2490 = vmin.f32 %v2474, 1.0
          %v2491 = vmin.f32 %v2475, 1.0
          %v2492 = vmin.f32 %v2476, 1.0
          %v2493 = vmin.f32 %v2477, 1.0
          %v2494 = vmin.f32 %v2478, 1.0
          %v2495 = vmin.f32 %v2479, 1.0
          %v2496 = vmin.f32 %v2480, 1.0
          %v2497 = vmin.f32 %v2481, 1.0
          %v2498 = vmin.f32 %v2482, 1.0
          %v2499 = vmin.f32 %v2483, 1.0
          %v2500 = vmin.f32 %v2484, 1.0
          %v2501 = vmin.f32 %v2485, 1.0
          %v2502 = vmin.f32 %v2486, 1.0
          %v2503 = vlog2.pop %v2487
          %v2504 = vmul.f32 %v2503, 0.6931472
          %v2505 = vlog2.pop %v2488
          %v2506 = vmul.f32 %v2505, 0.6931472
          %v2507 = vlog2.pop %v2489
          %v2508 = vmul.f32 %v2507, 0.6931472
          %v2509 = vlog2.pop %v2490
          %v2510 = vmul.f32 %v2509, 0.6931472
          %v2511 = vlog2.pop %v2491
          %v2512 = vmul.f32 %v2511, 0.6931472
          %v2513 = vlog2.pop %v2492
          %v2514 = vmul.f32 %v2513, 0.6931472
          %v2515 = vlog2.pop %v2493
          %v2516 = vmul.f32 %v2515, 0.6931472
          %v2517 = vlog2.pop %v2494
          %v2518 = vmul.f32 %v2517, 0.6931472
          %v2519 = vlog2.pop %v2495
          %v2520 = vmul.f32 %v2519, 0.6931472
          %v2521 = vlog2.pop %v2496
          %v2522 = vmul.f32 %v2521, 0.6931472
          %v2523 = vlog2.pop %v2497
          %v2524 = vmul.f32 %v2523, 0.6931472
          %v2525 = vlog2.pop %v2498
          %v2526 = vmul.f32 %v2525, 0.6931472
          %v2527 = vlog2.pop %v2499
          %v2528 = vmul.f32 %v2527, 0.6931472
          %v2529 = vlog2.pop %v2500
          %v2530 = vmul.f32 %v2529, 0.6931472
          %v2531 = vlog2.pop %v2501
          %v2532 = vmul.f32 %v2531, 0.6931472
          %v2533 = vlog2.pop %v2502
          %v2534 = vmul.f32 %v2533, 0.6931472
          %v2535 = vadd.f32 %v2311, %v2504
          %v2536 = vadd.f32 %v2312, %v2506
          %v2537 = vadd.f32 %v2313, %v2508
          %v2538 = vadd.f32 %v2314, %v2510
          %v2539 = vadd.f32 %v2315, %v2512
          %v2540 = vadd.f32 %v2316, %v2514
          %v2541 = vadd.f32 %v2317, %v2516
          %v2542 = vadd.f32 %v2318, %v2518
          %v2543 = vadd.f32 %v2319, %v2520
          %v2544 = vadd.f32 %v2320, %v2522
          %v2545 = vadd.f32 %v2321, %v2524
          %v2546 = vadd.f32 %v2322, %v2526
          %v2547 = vadd.f32 %v2323, %v2528
          %v2548 = vadd.f32 %v2324, %v2530
          %v2549 = vadd.f32 %v2325, %v2532
          %v2550 = vadd.f32 %v2326, %v2534
          %v2551 = vadd.f32 %v2391, %v2535
          %v2552 = vadd.f32 %v2392, %v2536
          %v2553 = vadd.f32 %v2393, %v2537
          %v2554 = vadd.f32 %v2394, %v2538
          %v2555 = vadd.f32 %v2395, %v2539
          %v2556 = vadd.f32 %v2396, %v2540
          %v2557 = vadd.f32 %v2397, %v2541
          %v2558 = vadd.f32 %v2398, %v2542
          %v2559 = vadd.f32 %v2399, %v2543
          %v2560 = vadd.f32 %v2400, %v2544
          %v2561 = vadd.f32 %v2401, %v2545
          %v2562 = vadd.f32 %v2402, %v2546
          %v2563 = vadd.f32 %v2403, %v2547
          %v2564 = vadd.f32 %v2404, %v2548
          %v2565 = vadd.f32 %v2405, %v2549
          %v2566 = vadd.f32 %v2406, %v2550
          %v2567 = vlaneseq
          %v2568 = vshrl.u32 %v2567, 7
          %v2569 = vadd.s32 %v2568, 8
          %v2570 = vadd.s32 %v2568, 16
          %v2571 = vadd.s32 %v2568, 24
          %v2572 = vadd.s32 %v2568, 32
          %v2573 = vadd.s32 %v2568, 40
          %v2574 = vadd.s32 %v2568, 48
          %v2575 = vadd.s32 %v2568, 56
          %v2576 = vadd.s32 %v2568, 64
          %v2577 = vadd.s32 %v2568, 72
          %v2578 = vadd.s32 %v2568, 80
          %v2579 = vadd.s32 %v2568, 88
          %v2580 = vadd.s32 %v2568, 96
          %v2581 = vadd.s32 %v2568, 104
          %v2582 = vadd.s32 %v2568, 112
          %v2583 = vadd.s32 %v2568, 120
          %vm2584 = vcmp.eq.s32.totalorder %v2568, %v233
          %vm2585 = vcmp.eq.s32.totalorder %v2569, %v233
          %vm2586 = vcmp.eq.s32.totalorder %v2570, %v233
          %vm2587 = vcmp.eq.s32.totalorder %v2571, %v233
          %vm2588 = vcmp.eq.s32.totalorder %v2572, %v233
          %vm2589 = vcmp.eq.s32.totalorder %v2573, %v233
          %vm2590 = vcmp.eq.s32.totalorder %v2574, %v233
          %vm2591 = vcmp.eq.s32.totalorder %v2575, %v233
          %vm2592 = vcmp.eq.s32.totalorder %v2576, %v233
          %vm2593 = vcmp.eq.s32.totalorder %v2577, %v233
          %vm2594 = vcmp.eq.s32.totalorder %v2578, %v233
          %vm2595 = vcmp.eq.s32.totalorder %v2579, %v233
          %vm2596 = vcmp.eq.s32.totalorder %v2580, %v233
          %vm2597 = vcmp.eq.s32.totalorder %v2581, %v233
          %vm2598 = vcmp.eq.s32.totalorder %v2582, %v233
          %vm2599 = vcmp.eq.s32.totalorder %v2583, %v233
          %2601 = vset.pattern.permute.xlu0 0
          %2602 = vperm.xlu0 %2601, %v2551
          %v2603 = vpop.permute.xlu0 %2602
          %2606 = vset.pattern.permute.xlu0 0
          %2607 = vperm.xlu0 %2606, %v2552
          %v2608 = vpop.permute.xlu0 %2607
          %2611 = vset.pattern.permute.xlu0 0
          %2612 = vperm.xlu0 %2611, %v2553
          %v2613 = vpop.permute.xlu0 %2612
          %2616 = vset.pattern.permute.xlu0 0
          %2617 = vperm.xlu0 %2616, %v2554
          %v2618 = vpop.permute.xlu0 %2617
          %2621 = vset.pattern.permute.xlu0 0
          %2622 = vperm.xlu0 %2621, %v2555
          %v2623 = vpop.permute.xlu0 %2622
          %2626 = vset.pattern.permute.xlu0 0
          %2627 = vperm.xlu0 %2626, %v2556
          %v2628 = vpop.permute.xlu0 %2627
          %2631 = vset.pattern.permute.xlu0 0
          %2632 = vperm.xlu0 %2631, %v2557
          %v2633 = vpop.permute.xlu0 %2632
          %2636 = vset.pattern.permute.xlu0 0
          %2637 = vperm.xlu0 %2636, %v2558
          %v2638 = vpop.permute.xlu0 %2637
          %2641 = vset.pattern.permute.xlu0 0
          %2642 = vperm.xlu0 %2641, %v2559
          %v2643 = vpop.permute.xlu0 %2642
          %2646 = vset.pattern.permute.xlu0 0
          %2647 = vperm.xlu0 %2646, %v2560
          %v2648 = vpop.permute.xlu0 %2647
          %2651 = vset.pattern.permute.xlu0 0
          %2652 = vperm.xlu0 %2651, %v2561
          %v2653 = vpop.permute.xlu0 %2652
          %2656 = vset.pattern.permute.xlu0 0
          %2657 = vperm.xlu0 %2656, %v2562
          %v2658 = vpop.permute.xlu0 %2657
          %2661 = vset.pattern.permute.xlu0 0
          %2662 = vperm.xlu0 %2661, %v2563
          %v2663 = vpop.permute.xlu0 %2662
          %2666 = vset.pattern.permute.xlu0 0
          %2667 = vperm.xlu0 %2666, %v2564
          %v2668 = vpop.permute.xlu0 %2667
          %2671 = vset.pattern.permute.xlu0 0
          %2672 = vperm.xlu0 %2671, %v2565
          %v2673 = vpop.permute.xlu0 %2672
          %2676 = vset.pattern.permute.xlu0 0
          %2677 = vperm.xlu0 %2676, %v2566
          %v2678 = vpop.permute.xlu0 %2677
          %v2680 = vsel %vm2584, %v2603, 0.0
          %v2681 = vsel %vm2585, %v2608, 0.0
          %v2682 = vsel %vm2586, %v2613, 0.0
          %v2683 = vsel %vm2587, %v2618, 0.0
          %v2684 = vsel %vm2588, %v2623, 0.0
          %v2685 = vsel %vm2589, %v2628, 0.0
          %v2686 = vsel %vm2590, %v2633, 0.0
          %v2687 = vsel %vm2591, %v2638, 0.0
          %v2688 = vsel %vm2592, %v2643, 0.0
          %v2689 = vsel %vm2593, %v2648, 0.0
          %v2690 = vsel %vm2594, %v2653, 0.0
          %v2691 = vsel %vm2595, %v2658, 0.0
          %v2692 = vsel %vm2596, %v2663, 0.0
          %v2693 = vsel %vm2597, %v2668, 0.0
          %v2694 = vsel %vm2598, %v2673, 0.0
          %v2695 = vsel %vm2599, %v2678, 0.0
          %v2696 = vadd.f32 %v2680, %v2681
          %v2697 = vadd.f32 %v2696, %v2682
          %v2698 = vadd.f32 %v2697, %v2683
          %v2699 = vadd.f32 %v2698, %v2684
          %v2700 = vadd.f32 %v2699, %v2685
          %v2701 = vadd.f32 %v2700, %v2686
          %v2702 = vadd.f32 %v2701, %v2687
          %v2703 = vadd.f32 %v2702, %v2688
          %v2704 = vadd.f32 %v2703, %v2689
          %v2705 = vadd.f32 %v2704, %v2690
          %v2706 = vadd.f32 %v2705, %v2691
          %v2707 = vadd.f32 %v2706, %v2692
          %v2708 = vadd.f32 %v2707, %v2693
          %v2709 = vadd.f32 %v2708, %v2694
          %v2710 = vadd.f32 %v2709, %v2695
          %v2711 = vrot.slane %v2710, 4
          %v2712 = vadd.f32 %v2710, %v2711
          %v2713 = vrot.slane %v2712, 2
          %v2714 = vadd.f32 %v2712, %v2713
          %v2715 = vrot.slane %v2714, 1
          %v2716 = vadd.f32 %v2714, %v2715
          %2717 = vst [vmem:[%s192] sm:$0x1] %v2716
        $region40: #{tpu_custom_call.1} parent=27 // pred_fallthru
          _
        %s2718 = sand.u32 %s93, 1
        %s2719 = scalar_lea.sflag [#allocation9], %s2718
        %s2720 = sand.u32 %s93, 1
        %s2721 = scalar_lea.vmem [#allocation10], %s2720
        // Predicated region
        $region41: #{tpu_custom_call.1} parent=27 // pred_check
          %p2722 = pneg %p103
        $region42: #{tpu_custom_call.1} parent=27 // pred_check_branch
          %2724 = sbr.rel (%p2722) target = $region44
        $region43: #{tpu_custom_call.1} parent=27 // pred_region
          %s2726 = ssub.s32 16, 16
          %2727 = vsyncadd %s2719, %s2726
          %s2728 = smul.addr %s23, 16
          %s2729 = scalar_lea.hbm %s2, %s2728
          %s2731 = sshll.u32 %s2721, 4
          %s2732 = int_to_ptr.vmem [resolvable:$true] %s2731
          %2734 = dma.vmem_to_hbm [thread:$0]  %s2732, 16, %s2729, %s2719
        $region44: #{tpu_custom_call.1} parent=27 // pred_fallthru
          _
      $region28: #{tpu_custom_call.1} parent=5 // pred_fallthru
        _
      %p2735 = scmp.le.s32.totalorder 2, %s14
      // Predicated region
      $region45: #{tpu_custom_call.1} parent=5 // pred_check
        %p2736 = pneg %p2735
      $region46: #{tpu_custom_call.1} parent=5 // pred_check_branch
        %2738 = sbr.rel (%p2736) target = $region48
      $region47: #{tpu_custom_call.1} parent=5 // pred_region
        %s2739 = ssub.s32 %s14, 2
        // Predicated region
        $region49: #{tpu_custom_call.1} parent=47 // pred_check
          %p2740 = pneg %p109
        $region50: #{tpu_custom_call.1} parent=47 // pred_check_branch
          %2742 = sbr.rel (%p2740) target = $region52
        $region51: #{tpu_custom_call.1} parent=47 // pred_region
          %s2743 = sand.u32 %s94, 1
          %s2744 = scalar_lea.sflag [#allocation9], %s2743
          %s2745 = sand.u32 %s94, 1
          %s2746 = scalar_lea.vmem [#allocation10], %s2745
          %2747 = dma.done %s2744, 16
        $region52: #{tpu_custom_call.1} parent=47 // pred_fallthru
          _
      $region48: #{tpu_custom_call.1} parent=5 // pred_fallthru
        _
    $region6: #{tpu_custom_call.1} parent=1 // loop_footer
      %s18 = sadd.s32 1, %s14
    $region7: #{tpu_custom_call.1} parent=1 // loop_footer_branch
      %13 = sbr.rel target = $region3
    $region8: #{tpu_custom_call.1} parent=1 // loop_exit
      _
    %2748 = vsyncpa [#allocation8], 1
    %s2749 = scalar_lea.sflag [#allocation8], 1
    %2750 = vsyncpa %s2749, 1
    %2751 = vsyncpa [#allocation9], 1
    %s2752 = scalar_lea.sflag [#allocation9], 1
    %2753 = vsyncpa %s2752, 1

</llo_original>
